<compile_context>
chip_gen: v7x
topology: tpu7x:2x2x1
jax: 0.10.0
libtpu: 0.0.40
codegen_flags: <defaults>
</compile_context>

<pallas_src>
import math
import jax
import jax.numpy as jnp
from jax.experimental import pallas as pl
from jax.experimental.pallas import tpu as pltpu

C = 32                    # per-plane output channels (output_coordinate_dim)
NS = 4                    # multires scales [1, 2, 4, 8]
NP = 6                    # 2-D coordinate combos of a 4-D point
FEAT = NS * C             # 128 = HexPlane feat_dim
W_HID = 64                # Deformation net width
OUT_PAD = 16              # packed head-output lanes: [dx(3)|ds(3)|dr(4)|pad(6)]
GAUSS_DIM = 10            # used lanes of the packed residual slab

assert FEAT == 128, "lane packing below assumes 4 scales x 32 channels"

COO_COMBS = [(0, 1), (0, 2), (0, 3), (1, 2), (1, 3), (2, 3)]
BASE_RESO = [64, 64, 64, 25]
MULTIRES = [1, 2, 4, 8]
BOUNDS = 1.6


# ----------------------------- Pallas kernel --------------------------------
def deform_kernel(interp_ref, gauss_ref,
                  w0_ref, b0_ref, w1_ref, b1_ref, w2_ref, b2_ref,
                  out_ref):
    # product of the 6 (already corner-reduced) plane features, per scale
    feat = interp_ref[0].astype(jnp.float32)
    for p in range(1, NP):
        feat = feat * interp_ref[p].astype(jnp.float32)        # (tile, 128)

    # feature_out: Linear(128 -> 64)   (D=1 -> no extra ReLU/Linear pairs)
    h = jnp.dot(feat.astype(jnp.bfloat16), w0_ref[...],
                preferred_element_type=jnp.float32) + b0_ref[...]
    h = jnp.maximum(h, 0.0)                                    # heads start w/ ReLU

    # fused head layer 1: [pos | scales | rot] first Linears -> (tile, 192)
    t = jnp.dot(h.astype(jnp.bfloat16), w1_ref[...],
                preferred_element_type=jnp.float32) + b1_ref[...]
    t = jnp.maximum(t, 0.0)

    # fused head layer 2: block-diagonal (192, 16) -> packed deltas
    delta = jnp.dot(t.astype(jnp.bfloat16), w2_ref[...],
                    preferred_element_type=jnp.float32) + b2_ref[...]

    # residual add on the packed [pt|sc|rot|pad] slab; single lane-padded store
    out_ref[...] = gauss_ref[...] + delta


def _choose_tile(n):
    # biggest tile that still leaves >=2 grid steps (keeps both v7x TCs busy);
    # 512 amortizes the ~0.35us/step overhead on v5e/v6e once N is large.
    for t in (512, 256, 128):
        if n >= 2 * t:
            return t
    return 128


def run_deform(interp_bf16, point3, scales3, rot4, opac1, packed):
    """interp_bf16: (6, N, 128) bf16. Returns (pts, scales, rotations, opacity)."""
    N = point3.shape[0]
    tile = _choose_tile(N)
    n_pad = (-N) % tile

    gauss = jnp.concatenate(
        [point3, scales3, rot4,
         jnp.zeros((N, OUT_PAD - GAUSS_DIM), jnp.float32)], axis=-1)   # (N, 16)

    if n_pad:
        interp_bf16 = jnp.pad(interp_bf16, ((0, 0), (0, n_pad), (0, 0)))
        gauss = jnp.pad(gauss, ((0, n_pad), (0, 0)))
    n_total = N + n_pad
    grid = (n_total // tile,)

    nmap = lambda i: (i, 0)
    pmap = lambda i: (0, 0)

    in_specs = [
        pl.BlockSpec((NP, tile, FEAT), lambda i: (0, i, 0)),   # interp
        pl.BlockSpec((tile, OUT_PAD), nmap),                   # packed residuals
        pl.BlockSpec(packed["w0"].shape, pmap),
        pl.BlockSpec(packed["b0"].shape, pmap),
        pl.BlockSpec(packed["w1"].shape, pmap),
        pl.BlockSpec(packed["b1"].shape, pmap),
        pl.BlockSpec(packed["w2"].shape, pmap),
        pl.BlockSpec(packed["b2"].shape, pmap),
    ]

    out = pl.pallas_call(
        deform_kernel,
        grid=grid,
        in_specs=in_specs,
        out_specs=pl.BlockSpec((tile, OUT_PAD), nmap),
        out_shape=jax.ShapeDtypeStruct((n_total, OUT_PAD), jnp.float32),
        compiler_params=pltpu.CompilerParams(
            dimension_semantics=("parallel",),
            vmem_limit_bytes=48 * 1024 * 1024),   # <=~48 MiB: safe on v7x's 64 MiB
    )(interp_bf16, gauss,
      packed["w0"], packed["b0"], packed["w1"], packed["b1"],
      packed["w2"], packed["b2"])

    out = out[:N]
    # opacity: no_do=True -> passthrough, never touches the kernel
    return out[:, 0:3], out[:, 3:6], out[:, 6:10], opac1


# ------------------------------ JAX glue -------------------------------------
def bilinear_interp(plane, x, y):
    """F.grid_sample(bilinear, align_corners=True, padding_mode='border') for a
    single (C,H,W) plane and normalized coords x,y (N,).  The corner gather is
    data-dependent, so it stays in XLA; the weighted corner sum is fused here."""
    _, H, W = plane.shape
    fx = jnp.clip((x + 1.0) * 0.5 * (W - 1), 0.0, float(W - 1))
    fy = jnp.clip((y + 1.0) * 0.5 * (H - 1), 0.0, float(H - 1))
    ix0 = jnp.floor(fx)
    iy0 = jnp.floor(fy)
    wx1 = fx - ix0
    wy1 = fy - iy0
    ix0i = ix0.astype(jnp.int32)
    iy0i = iy0.astype(jnp.int32)
    ix1i = jnp.minimum(ix0i + 1, W - 1)
    iy1i = jnp.minimum(iy0i + 1, H - 1)

    def gather(iy, ix):
        return plane[:, iy, ix].T                    # (N, C)

    return (gather(iy0i, ix0i) * ((1.0 - wx1) * (1.0 - wy1))[:, None]
            + gather(iy0i, ix1i) * (wx1 * (1.0 - wy1))[:, None]
            + gather(iy1i, ix0i) * ((1.0 - wx1) * wy1)[:, None]
            + gather(iy1i, ix1i) * (wx1 * wy1)[:, None])


def build_planes(key):
    planes = {}
    for s, mult in enumerate(MULTIRES):
        reso = [r * mult for r in BASE_RESO[:3]] + BASE_RESO[3:]
        for p, (a, b) in enumerate(COO_COMBS):
            H, W = reso[b], reso[a]
            if 3 in (a, b):                           # time planes -> ones
                planes[(s, p)] = jnp.ones((C, H, W), jnp.float32)
            else:
                key, sub = jax.random.split(key)
                planes[(s, p)] = jax.random.uniform(
                    sub, (C, H, W), jnp.float32, minval=0.1, maxval=0.5)
    return planes, key


def build_interp_features(planes, point3, times1):
    """Normalize pts, append time, bilinear-interpolate every plane/scale and
    concat scales along channels -> (6 planes, N, 128) f32."""
    aabb0 = jnp.full((3,), BOUNDS, jnp.float32)
    aabb1 = jnp.full((3,), -BOUNDS, jnp.float32)
    pts_n = (point3 - aabb0) * (2.0 / (aabb1 - aabb0)) - 1.0
    pts4 = jnp.concatenate([pts_n, times1], axis=-1)  # (N, 4)

    per_plane = []
    for p, (a, b) in enumerate(COO_COMBS):
        per_scale = [bilinear_interp(planes[(s, p)], pts4[:, a], pts4[:, b])
                     for s in range(NS)]              # NS x (N, 32)
        per_plane.append(jnp.concatenate(per_scale, axis=-1))   # (N, 128)
    return jnp.stack(per_plane, axis=0)               # (6, N, 128)


def init_params(key):
    def xavier(k, fi, fo):
        lim = math.sqrt(6.0 / (fi + fo))
        return jax.random.uniform(k, (fi, fo), jnp.float32, -lim, lim)

    def bias(k, fi, fo):
        lim = 1.0 / math.sqrt(fi)
        return jax.random.uniform(k, (1, fo), jnp.float32, -lim, lim)

    shapes = {"w0": (FEAT, W_HID), "b0": (FEAT, W_HID),
              "wp1": (W_HID, W_HID), "bp1": (W_HID, W_HID),
              "wp2": (W_HID, 3), "bp2": (W_HID, 3),
              "ws1": (W_HID, W_HID), "bs1": (W_HID, W_HID),
              "ws2": (W_HID, 3), "bs2": (W_HID, 3),
              "wr1": (W_HID, W_HID), "br1": (W_HID, W_HID),
              "wr2": (W_HID, 4), "br2": (W_HID, 4)}
    params = {}
    for name, (fi, fo) in shapes.items():
        key, sub = jax.random.split(key)
        params[name] = bias(sub, fi, fo) if name.startswith("b") else xavier(sub, fi, fo)
    return params, key


def pack_params(params):
    """Fuse head layers and cast matmul weights to bf16 (biases stay f32)."""
    w2 = jnp.zeros((3 * W_HID, OUT_PAD), jnp.float32)
    w2 = w2.at[0 * W_HID:1 * W_HID, 0:3].set(params["wp2"])
    w2 = w2.at[1 * W_HID:2 * W_HID, 3:6].set(params["ws2"])
    w2 = w2.at[2 * W_HID:3 * W_HID, 6:10].set(params["wr2"])
    b2 = jnp.zeros((1, OUT_PAD), jnp.float32)
    b2 = b2.at[:, 0:3].set(params["bp2"])
    b2 = b2.at[:, 3:6].set(params["bs2"])
    b2 = b2.at[:, 6:10].set(params["br2"])
    return {
        "w0": params["w0"].astype(jnp.bfloat16),
        "b0": params["b0"],
        "w1": jnp.concatenate(
            [params["wp1"], params["ws1"], params["wr1"]], axis=1
        ).astype(jnp.bfloat16),
        "b1": jnp.concatenate(
            [params["bp1"], params["bs1"], params["br1"]], axis=1),
        "w2": w2.astype(jnp.bfloat16),
        "b2": b2,
    }


# --------------------------- references --------------------------------------
def reference_bf16(interp_bf16, point3, scales3, rot4, opac1, packed):
    """Plain-JAX mirror of the kernel math (same bf16 operands, f32 accumulate)."""
    feat = jnp.prod(interp_bf16.astype(jnp.float32), axis=0)
    h = jnp.maximum(jnp.dot(feat.astype(jnp.bfloat16), packed["w0"],
                            preferred_element_type=jnp.float32) + packed["b0"], 0.0)
    t = jnp.maximum(jnp.dot(h.astype(jnp.bfloat16), packed["w1"],
                            preferred_element_type=jnp.float32) + packed["b1"], 0.0)
    delta = jnp.dot(t.astype(jnp.bfloat16), packed["w2"],
                    preferred_element_type=jnp.float32) + packed["b2"]
    return (point3 + delta[:, 0:3], scales3 + delta[:, 3:6],
            rot4 + delta[:, 6:10], opac1)


def reference_f32(interp_f32, point3, scales3, rot4, opac1, params):
    """Original (PyTorch) f32 semantics, for a loose sanity check."""
    features = jnp.prod(interp_f32, axis=0)
    h = jnp.maximum(features @ params["w0"] + params["b0"], 0.0)

    def head(w1, b1, w2, b2):
        return jnp.maximum(h @ w1 + b1, 0.0) @ w2 + b2

    pts = point3 + head(params["wp1"], params["bp1"], params["wp2"], params["bp2"])
    sc = scales3 + head(params["ws1"], params["bs1"], params["ws2"], params["bs2"])
    rt = rot4 + head(params["wr1"], params["br1"], params["wr2"], params["br2"])
    return pts, sc, rt, opac1


# ------------------------------- main ----------------------------------------
if __name__ == "__main__":
    key = jax.random.PRNGKey(0)
    N = 256

    planes, key = build_planes(key)
    params, key = init_params(key)
    packed = pack_params(params)

    key, k1, k2, k3, k4, k5 = jax.random.split(key, 6)
    point3 = jax.random.uniform(k1, (N, 3), jnp.float32, -BOUNDS, BOUNDS)
    scales3 = jax.random.uniform(k2, (N, 3), jnp.float32, -1.0, 1.0)
    rot4 = jax.random.uniform(k3, (N, 4), jnp.float32, -1.0, 1.0)
    opac1 = jax.random.uniform(k4, (N, 1), jnp.float32, 0.0, 1.0)
    times1 = jax.random.uniform(k5, (N, 1), jnp.float32, -1.0, 1.0)

    # Glue: grid_sample corner gather + corner weighted-sum (XLA fuses them),
    # then a single bf16 (6, N, 128) tensor is handed to the kernel.
    # TODO(synk): timenet + positional-encoding buffers are dead code in
    # forward_dynamic and are intentionally not implemented.
    interp_f32 = build_interp_features(planes, point3, times1)
    interp = interp_f32.astype(jnp.bfloat16)

    outs = run_deform(interp, point3, scales3, rot4, opac1, packed)
    outs = jax.block_until_ready(outs)

    # tight check against the bf16-matched reference
    refs = reference_bf16(interp, point3, scales3, rot4, opac1, packed)
    for o, r in zip(outs, refs):
        assert o.shape == r.shape
        assert jnp.allclose(o, r, rtol=1e-3, atol=1e-3)

    # loose check against the original f32 semantics (bf16 storage/matmul noise)
    refs32 = reference_f32(interp_f32, point3, scales3, rot4, opac1, params)
    for o, r in zip(outs, refs32):
        assert jnp.allclose(o, r, rtol=5e-2, atol=5e-2)

    print("KERNEL_OK")
</pallas_src>

<mosaic_0001>
module attributes {stable_mosaic.version = 11 : i64} {
  func.func @deform_kernel(%arg0: i32, %arg1: memref<6x128x128xbf16, #tpu.memory_space<vmem>>, %arg2: memref<128x16xf32, #tpu.memory_space<vmem>>, %arg3: memref<128x64xbf16, #tpu.memory_space<vmem>>, %arg4: memref<1x64xf32, #tpu.memory_space<vmem>>, %arg5: memref<64x192xbf16, #tpu.memory_space<vmem>>, %arg6: memref<1x192xf32, #tpu.memory_space<vmem>>, %arg7: memref<192x16xbf16, #tpu.memory_space<vmem>>, %arg8: memref<1x16xf32, #tpu.memory_space<vmem>>, %arg9: memref<128x16xf32, #tpu.memory_space<vmem>>) attributes {dimension_semantics = [#tpu.dimension_semantics<parallel>], iteration_bounds = array<i64: 2>, scalar_prefetch = 0 : i64, scratch_operands = 0 : i64, tpu.core_type = #tpu.core_type<tc>, window_params = [{transform_indices = @transform_0, window_bounds = array<i64: 6, 128, 128>}, {transform_indices = @transform_1, window_bounds = array<i64: 128, 16>}, {pipeline_mode = #tpu.pipeline_mode<synchronous>, transform_indices = @transform_2, window_bounds = array<i64: 128, 64>}, {pipeline_mode = #tpu.pipeline_mode<synchronous>, transform_indices = @transform_3, window_bounds = array<i64: 1, 64>}, {pipeline_mode = #tpu.pipeline_mode<synchronous>, transform_indices = @transform_4, window_bounds = array<i64: 64, 192>}, {pipeline_mode = #tpu.pipeline_mode<synchronous>, transform_indices = @transform_5, window_bounds = array<i64: 1, 192>}, {pipeline_mode = #tpu.pipeline_mode<synchronous>, transform_indices = @transform_6, window_bounds = array<i64: 192, 16>}, {pipeline_mode = #tpu.pipeline_mode<synchronous>, transform_indices = @transform_7, window_bounds = array<i64: 1, 16>}, {transform_indices = @transform_8, window_bounds = array<i64: 128, 16>}]} {
    %c0 = arith.constant 0 : index
    %c0_0 = arith.constant 0 : index
    %c0_1 = arith.constant 0 : index
    %0 = vector.load %arg1[%c0, %c0_0, %c0_1] : memref<6x128x128xbf16, #tpu.memory_space<vmem>>, vector<1x128x128xbf16>
    %1 = vector.shape_cast %0 : vector<1x128x128xbf16> to vector<128x128xbf16>
    %2 = arith.extf %1 : vector<128x128xbf16> to vector<128x128xf32>
    %c1 = arith.constant 1 : index
    %c0_2 = arith.constant 0 : index
    %c0_3 = arith.constant 0 : index
    %3 = vector.load %arg1[%c1, %c0_2, %c0_3] : memref<6x128x128xbf16, #tpu.memory_space<vmem>>, vector<1x128x128xbf16>
    %4 = vector.shape_cast %3 : vector<1x128x128xbf16> to vector<128x128xbf16>
    %5 = arith.extf %4 : vector<128x128xbf16> to vector<128x128xf32>
    %6 = arith.mulf %2, %5 : vector<128x128xf32>
    %c2 = arith.constant 2 : index
    %c0_4 = arith.constant 0 : index
    %c0_5 = arith.constant 0 : index
    %7 = vector.load %arg1[%c2, %c0_4, %c0_5] : memref<6x128x128xbf16, #tpu.memory_space<vmem>>, vector<1x128x128xbf16>
    %8 = vector.shape_cast %7 : vector<1x128x128xbf16> to vector<128x128xbf16>
    %9 = arith.extf %8 : vector<128x128xbf16> to vector<128x128xf32>
    %10 = arith.mulf %6, %9 : vector<128x128xf32>
    %c3 = arith.constant 3 : index
    %c0_6 = arith.constant 0 : index
    %c0_7 = arith.constant 0 : index
    %11 = vector.load %arg1[%c3, %c0_6, %c0_7] : memref<6x128x128xbf16, #tpu.memory_space<vmem>>, vector<1x128x128xbf16>
    %12 = vector.shape_cast %11 : vector<1x128x128xbf16> to vector<128x128xbf16>
    %13 = arith.extf %12 : vector<128x128xbf16> to vector<128x128xf32>
    %14 = arith.mulf %10, %13 : vector<128x128xf32>
    %c4 = arith.constant 4 : index
    %c0_8 = arith.constant 0 : index
    %c0_9 = arith.constant 0 : index
    %15 = vector.load %arg1[%c4, %c0_8, %c0_9] : memref<6x128x128xbf16, #tpu.memory_space<vmem>>, vector<1x128x128xbf16>
    %16 = vector.shape_cast %15 : vector<1x128x128xbf16> to vector<128x128xbf16>
    %17 = arith.extf %16 : vector<128x128xbf16> to vector<128x128xf32>
    %18 = arith.mulf %14, %17 : vector<128x128xf32>
    %c5 = arith.constant 5 : index
    %c0_10 = arith.constant 0 : index
    %c0_11 = arith.constant 0 : index
    %19 = vector.load %arg1[%c5, %c0_10, %c0_11] : memref<6x128x128xbf16, #tpu.memory_space<vmem>>, vector<1x128x128xbf16>
    %20 = vector.shape_cast %19 : vector<1x128x128xbf16> to vector<128x128xbf16>
    %21 = arith.extf %20 : vector<128x128xbf16> to vector<128x128xf32>
    %22 = arith.mulf %18, %21 : vector<128x128xf32>
    %23 = arith.truncf %22 : vector<128x128xf32> to vector<128x128xbf16>
    %c0_12 = arith.constant 0 : index
    %c0_13 = arith.constant 0 : index
    %24 = vector.load %arg3[%c0_12, %c0_13] : memref<128x64xbf16, #tpu.memory_space<vmem>>, vector<128x64xbf16>
    %cst = arith.constant dense<0.000000e+00> : vector<128x64xf32>
    %25 = tpu.matmul %23, %24, %cst {dimension_numbers = #tpu.dot_dimension_numbers<[1], [0], [0], [1], [0, 0, 1, 1], [], []>} : vector<128x128xbf16>, vector<128x64xbf16>, vector<128x64xf32> -> vector<128x64xf32>
    %c0_14 = arith.constant 0 : index
    %c0_15 = arith.constant 0 : index
    %26 = vector.load %arg4[%c0_14, %c0_15] : memref<1x64xf32, #tpu.memory_space<vmem>>, vector<1x64xf32>
    %27 = vector.broadcast %26 : vector<1x64xf32> to vector<128x64xf32>
    %28 = arith.addf %25, %27 : vector<128x64xf32>
    %cst_16 = arith.constant 0.000000e+00 : f32
    %29 = vector.broadcast %cst_16 : f32 to vector<128x64xf32>
    %30 = arith.maximumf %28, %29 : vector<128x64xf32>
    %31 = arith.truncf %30 : vector<128x64xf32> to vector<128x64xbf16>
    %c0_17 = arith.constant 0 : index
    %c0_18 = arith.constant 0 : index
    %32 = vector.load %arg5[%c0_17, %c0_18] : memref<64x192xbf16, #tpu.memory_space<vmem>>, vector<64x192xbf16>
    %cst_19 = arith.constant dense<0.000000e+00> : vector<128x192xf32>
    %33 = tpu.matmul %31, %32, %cst_19 {dimension_numbers = #tpu.dot_dimension_numbers<[1], [0], [0], [1], [0, 0, 1, 1], [], []>} : vector<128x64xbf16>, vector<64x192xbf16>, vector<128x192xf32> -> vector<128x192xf32>
    %c0_20 = arith.constant 0 : index
    %c0_21 = arith.constant 0 : index
    %34 = vector.load %arg6[%c0_20, %c0_21] : memref<1x192xf32, #tpu.memory_space<vmem>>, vector<1x192xf32>
    %35 = vector.broadcast %34 : vector<1x192xf32> to vector<128x192xf32>
    %36 = arith.addf %33, %35 : vector<128x192xf32>
    %cst_22 = arith.constant 0.000000e+00 : f32
    %37 = vector.broadcast %cst_22 : f32 to vector<128x192xf32>
    %38 = arith.maximumf %36, %37 : vector<128x192xf32>
    %39 = arith.truncf %38 : vector<128x192xf32> to vector<128x192xbf16>
    %c0_23 = arith.constant 0 : index
    %c0_24 = arith.constant 0 : index
    %40 = vector.load %arg7[%c0_23, %c0_24] : memref<192x16xbf16, #tpu.memory_space<vmem>>, vector<192x16xbf16>
    %cst_25 = arith.constant dense<0.000000e+00> : vector<128x16xf32>
    %41 = tpu.matmul %39, %40, %cst_25 {dimension_numbers = #tpu.dot_dimension_numbers<[1], [0], [0], [1], [0, 0, 1, 1], [], []>} : vector<128x192xbf16>, vector<192x16xbf16>, vector<128x16xf32> -> vector<128x16xf32>
    %c0_26 = arith.constant 0 : index
    %c0_27 = arith.constant 0 : index
    %42 = vector.load %arg8[%c0_26, %c0_27] : memref<1x16xf32, #tpu.memory_space<vmem>>, vector<1x16xf32>
    %43 = vector.broadcast %42 : vector<1x16xf32> to vector<128x16xf32>
    %44 = arith.addf %41, %43 : vector<128x16xf32>
    %c0_28 = arith.constant 0 : index
    %c0_29 = arith.constant 0 : index
    %45 = vector.load %arg2[%c0_28, %c0_29] : memref<128x16xf32, #tpu.memory_space<vmem>>, vector<128x16xf32>
    %46 = arith.addf %45, %44 : vector<128x16xf32>
    %c0_30 = arith.constant 0 : index
    %c0_31 = arith.constant 0 : index
    %47 = vector.load %arg9[%c0_30, %c0_31] : memref<128x16xf32, #tpu.memory_space<vmem>>, vector<128x16xf32>
    tpu.vector_store %arg9[%c0_30, %c0_31], %46 {strides = array<i32>} : memref<128x16xf32, #tpu.memory_space<vmem>>, vector<128x16xf32>,
    return
  }
  func.func @transform_0(%arg0: i32) -> (i32, i32, i32) {
    %c0_i32 = arith.constant 0 : i32
    %c0_i32_0 = arith.constant 0 : i32
    %c0_i32_1 = arith.constant 0 : i32
    return %c0_i32, %arg0, %c0_i32_0 : i32, i32, i32
  }
  func.func @transform_1(%arg0: i32) -> (i32, i32) {
    %c0_i32 = arith.constant 0 : i32
    %c0_i32_0 = arith.constant 0 : i32
    return %arg0, %c0_i32 : i32, i32
  }
  func.func @transform_2(%arg0: i32) -> (i32, i32) {
    %c0_i32 = arith.constant 0 : i32
    %c0_i32_0 = arith.constant 0 : i32
    %c0_i32_1 = arith.constant 0 : i32
    return %c0_i32, %c0_i32_0 : i32, i32
  }
  func.func @transform_3(%arg0: i32) -> (i32, i32) {
    %c0_i32 = arith.constant 0 : i32
    %c0_i32_0 = arith.constant 0 : i32
    %c0_i32_1 = arith.constant 0 : i32
    return %c0_i32, %c0_i32_0 : i32, i32
  }
  func.func @transform_4(%arg0: i32) -> (i32, i32) {
    %c0_i32 = arith.constant 0 : i32
    %c0_i32_0 = arith.constant 0 : i32
    %c0_i32_1 = arith.constant 0 : i32
    return %c0_i32, %c0_i32_0 : i32, i32
  }
  func.func @transform_5(%arg0: i32) -> (i32, i32) {
    %c0_i32 = arith.constant 0 : i32
    %c0_i32_0 = arith.constant 0 : i32
    %c0_i32_1 = arith.constant 0 : i32
    return %c0_i32, %c0_i32_0 : i32, i32
  }
  func.func @transform_6(%arg0: i32) -> (i32, i32) {
    %c0_i32 = arith.constant 0 : i32
    %c0_i32_0 = arith.constant 0 : i32
    %c0_i32_1 = arith.constant 0 : i32
    return %c0_i32, %c0_i32_0 : i32, i32
  }
  func.func @transform_7(%arg0: i32) -> (i32, i32) {
    %c0_i32 = arith.constant 0 : i32
    %c0_i32_0 = arith.constant 0 : i32
    %c0_i32_1 = arith.constant 0 : i32
    return %c0_i32, %c0_i32_0 : i32, i32
  }
  func.func @transform_8(%arg0: i32) -> (i32, i32) {
    %c0_i32 = arith.constant 0 : i32
    %c0_i32_0 = arith.constant 0 : i32
    return %arg0, %c0_i32 : i32, i32
  }
}

</mosaic_0001>

<llo_original>
// kernel: tpu_custom_call.1
$region0: #{tpu_custom_call.1}
  #allocation0 [shape = 'u32[]', space=smem, size = 0x4, offset = 0x4, fixed_abs, tag = 'smem constant byte address 0x4 - core index']
  #allocation1 [shape = 'u32[144,128]{1,0:T(1,128)}', space=vmem, size = 0x12000, scoped, tag = 'internal scratch']
  #allocation4 [shape = 's32[]', space=sflag, size = 0x4, offset = 0, fixed_abs, tag = 'sflag constant byte address 0x0 - dummy sync flag']
  %s0 = inlined_call_operand.hbm [shape: bf16[6,256,128], index: 0, kind: input, shape index: {}]
  %s1 = inlined_call_operand.vmem [shape: f32[256,16], index: 1, kind: input, shape index: {}]
  %s2 = inlined_call_operand.vmem [shape: bf16[128,64], index: 2, kind: input, shape index: {}]
  %s3 = inlined_call_operand.vmem [shape: f32[1,64], index: 3, kind: input, shape index: {}]
  %s4 = inlined_call_operand.vmem [shape: bf16[64,192], index: 4, kind: input, shape index: {}]
  %s5 = inlined_call_operand.vmem [shape: f32[1,192], index: 5, kind: input, shape index: {}]
  %s6 = inlined_call_operand.vmem [shape: bf16[192,16], index: 6, kind: input, shape index: {}]
  %s7 = inlined_call_operand.vmem [shape: f32[1,16], index: 7, kind: input, shape index: {}]
  %s8 = inlined_call_operand.vmem [shape: f32[256,16], index: 8, kind: output, shape index: {}]
  %s9 = sld [smem:[#allocation0]]
  $region69: #{tpu_custom_call.1} parent=0
    _
  %s11 = ssub.s32 1, %s9
  %s12 = scalar_select 0, %s11, %s9
  $region1: #{tpu_custom_call.1} parent=0
    #allocation2 [shape = 'u8[393216]{0}', space=vmem, size = 0x60000, scoped, tag = 'input window, operand 0']
    #allocation3 [shape = 's32[2]{0}', space=sflag, size = 0x8, scoped, tag = 'scoped memory for tpu_custom_call.1']
    %13 = vsyncpa [#allocation3], 0
    %s14 = scalar_lea.sflag [#allocation3], 1
    %15 = vsyncpa %s14, 0
    loop: start=0, step=1, limit=4
    $region2: #{tpu_custom_call.1} parent=1 // loop_pre_header
      _
    $region3: #{tpu_custom_call.1} parent=1 // loop_header
      %s17 = sphi 0, %s21
      %p18 = scmp.ge.s32.totalorder %s17, 4
      %s27 = sphi 0, %s29
      %s30 = sphi 0, %s27
      %s31 = sphi 0, %s30
      %s47 = sphi 0, %s31
      %s53 = sphi 0, %s55
      %s56 = sphi 0, %s53
      %s57 = sphi 0, %s56
      %s73 = sphi 0, %s57
      %s77 = sphi 0, %s77
      %s79 = sphi 0, %s77
      %s80 = sphi 0, %s79
      %s94 = sphi 0, %s80
      %s98 = sphi 0, %s98
      %s100 = sphi 0, %s98
      %s101 = sphi 0, %s100
      %s115 = sphi 0, %s101
      %s119 = sphi 0, %s119
      %s121 = sphi 0, %s119
      %s122 = sphi 0, %s121
      %s136 = sphi 0, %s122
      %s140 = sphi 0, %s140
      %s142 = sphi 0, %s140
      %s143 = sphi 0, %s142
      %s157 = sphi 0, %s143
      %s161 = sphi 0, %s161
      %s163 = sphi 0, %s161
      %s164 = sphi 0, %s163
      %s178 = sphi 0, %s164
      %s182 = sphi 0, %s182
      %s184 = sphi 0, %s182
      %s185 = sphi 0, %s184
      %s199 = sphi 0, %s185
      %s205 = sphi 0, %s207
      %s208 = sphi 0, %s205
      %s209 = sphi 0, %s208
      %s225 = sphi 0, %s209
    $region4: #{tpu_custom_call.1} parent=1 // loop_header_branch
      %20 = sbr.rel (%p18) target = $region8
    $region5: #{tpu_custom_call.1} parent=1 // loop_body
      %s22 = ssub.s32 %s17, 1
      %s23 = ssub.s32 %s17, 2
      %s24 = sadd.s32 %s17, 1
      %s25 = ssub.s32 %s17, %s24
      %p26 = scmp.eq.s32.totalorder %s25, 0
      %s28 = sadd.s32 %s27, 1
      %s29 = scalar_select %p26, %s27, %s28
      %p32 = pneg %p26
      %p33 = scmp.eq.s32.totalorder %s17, 1
      %p34 = por %p32, %p33
      %p35 = scmp.ne.s32.totalorder %s27, %s30
      %p36 = scmp.eq.s32.totalorder %s17, 0
      %p37 = por %p35, %p36
      %p38 = scmp.ne.s32.totalorder %s27, %s30
      %p39 = scmp.eq.s32.totalorder %s22, 1
      %p40 = por %p38, %p39
      %p41 = scmp.ne.s32.totalorder %s30, %s31
      %p42 = scmp.eq.s32.totalorder %s22, 0
      %p43 = por %p41, %p42
      %p44 = scmp.ne.s32.totalorder %s30, %s31
      %p45 = scmp.eq.s32.totalorder %s23, 1
      %p46 = por %p44, %p45
      %p48 = scmp.ne.s32.totalorder %s31, %s47
      %p49 = scmp.eq.s32.totalorder %s23, 0
      %p50 = por %p48, %p49
      %s51 = ssub.s32 %s17, %s24
      %p52 = scmp.eq.s32.totalorder %s51, 0
      %s54 = sadd.s32 %s53, 1
      %s55 = scalar_select %p52, %s53, %s54
      %p58 = pneg %p52
      %p59 = scmp.eq.s32.totalorder %s17, 1
      %p60 = por %p58, %p59
      %p61 = scmp.ne.s32.totalorder %s53, %s56
      %p62 = scmp.eq.s32.totalorder %s17, 0
      %p63 = por %p61, %p62
      %p64 = scmp.ne.s32.totalorder %s53, %s56
      %p65 = scmp.eq.s32.totalorder %s22, 1
      %p66 = por %p64, %p65
      %p67 = scmp.ne.s32.totalorder %s56, %s57
      %p68 = scmp.eq.s32.totalorder %s22, 0
      %p69 = por %p67, %p68
      %p70 = scmp.ne.s32.totalorder %s56, %s57
      %p71 = scmp.eq.s32.totalorder %s23, 1
      %p72 = por %p70, %p71
      %p74 = scmp.ne.s32.totalorder %s57, %s73
      %p75 = scmp.eq.s32.totalorder %s23, 0
      %p76 = por %p74, %p75
      %s78 = sadd.s32 %s77, 1
      %p81 = scmp.eq.s32.totalorder %s17, 1
      %p82 = scmp.ne.s32.totalorder %s77, %s79
      %p83 = scmp.eq.s32.totalorder %s17, 0
      %p84 = por %p82, %p83
      %p85 = scmp.ne.s32.totalorder %s77, %s79
      %p86 = scmp.eq.s32.totalorder %s22, 1
      %p87 = por %p85, %p86
      %p88 = scmp.ne.s32.totalorder %s79, %s80
      %p89 = scmp.eq.s32.totalorder %s22, 0
      %p90 = por %p88, %p89
      %p91 = scmp.ne.s32.totalorder %s79, %s80
      %p92 = scmp.eq.s32.totalorder %s23, 1
      %p93 = por %p91, %p92
      %p95 = scmp.ne.s32.totalorder %s80, %s94
      %p96 = scmp.eq.s32.totalorder %s23, 0
      %p97 = por %p95, %p96
      %s99 = sadd.s32 %s98, 1
      %p102 = scmp.eq.s32.totalorder %s17, 1
      %p103 = scmp.ne.s32.totalorder %s98, %s100
      %p104 = scmp.eq.s32.totalorder %s17, 0
      %p105 = por %p103, %p104
      %p106 = scmp.ne.s32.totalorder %s98, %s100
      %p107 = scmp.eq.s32.totalorder %s22, 1
      %p108 = por %p106, %p107
      %p109 = scmp.ne.s32.totalorder %s100, %s101
      %p110 = scmp.eq.s32.totalorder %s22, 0
      %p111 = por %p109, %p110
      %p112 = scmp.ne.s32.totalorder %s100, %s101
      %p113 = scmp.eq.s32.totalorder %s23, 1
      %p114 = por %p112, %p113
      %p116 = scmp.ne.s32.totalorder %s101, %s115
      %p117 = scmp.eq.s32.totalorder %s23, 0
      %p118 = por %p116, %p117
      %s120 = sadd.s32 %s119, 1
      %p123 = scmp.eq.s32.totalorder %s17, 1
      %p124 = scmp.ne.s32.totalorder %s119, %s121
      %p125 = scmp.eq.s32.totalorder %s17, 0
      %p126 = por %p124, %p125
      %p127 = scmp.ne.s32.totalorder %s119, %s121
      %p128 = scmp.eq.s32.totalorder %s22, 1
      %p129 = por %p127, %p128
      %p130 = scmp.ne.s32.totalorder %s121, %s122
      %p131 = scmp.eq.s32.totalorder %s22, 0
      %p132 = por %p130, %p131
      %p133 = scmp.ne.s32.totalorder %s121, %s122
      %p134 = scmp.eq.s32.totalorder %s23, 1
      %p135 = por %p133, %p134
      %p137 = scmp.ne.s32.totalorder %s122, %s136
      %p138 = scmp.eq.s32.totalorder %s23, 0
      %p139 = por %p137, %p138
      %s141 = sadd.s32 %s140, 1
      %p144 = scmp.eq.s32.totalorder %s17, 1
      %p145 = scmp.ne.s32.totalorder %s140, %s142
      %p146 = scmp.eq.s32.totalorder %s17, 0
      %p147 = por %p145, %p146
      %p148 = scmp.ne.s32.totalorder %s140, %s142
      %p149 = scmp.eq.s32.totalorder %s22, 1
      %p150 = por %p148, %p149
      %p151 = scmp.ne.s32.totalorder %s142, %s143
      %p152 = scmp.eq.s32.totalorder %s22, 0
      %p153 = por %p151, %p152
      %p154 = scmp.ne.s32.totalorder %s142, %s143
      %p155 = scmp.eq.s32.totalorder %s23, 1
      %p156 = por %p154, %p155
      %p158 = scmp.ne.s32.totalorder %s143, %s157
      %p159 = scmp.eq.s32.totalorder %s23, 0
      %p160 = por %p158, %p159
      %s162 = sadd.s32 %s161, 1
      %p165 = scmp.eq.s32.totalorder %s17, 1
      %p166 = scmp.ne.s32.totalorder %s161, %s163
      %p167 = scmp.eq.s32.totalorder %s17, 0
      %p168 = por %p166, %p167
      %p169 = scmp.ne.s32.totalorder %s161, %s163
      %p170 = scmp.eq.s32.totalorder %s22, 1
      %p171 = por %p169, %p170
      %p172 = scmp.ne.s32.totalorder %s163, %s164
      %p173 = scmp.eq.s32.totalorder %s22, 0
      %p174 = por %p172, %p173
      %p175 = scmp.ne.s32.totalorder %s163, %s164
      %p176 = scmp.eq.s32.totalorder %s23, 1
      %p177 = por %p175, %p176
      %p179 = scmp.ne.s32.totalorder %s164, %s178
      %p180 = scmp.eq.s32.totalorder %s23, 0
      %p181 = por %p179, %p180
      %s183 = sadd.s32 %s182, 1
      %p186 = scmp.eq.s32.totalorder %s17, 1
      %p187 = scmp.ne.s32.totalorder %s182, %s184
      %p188 = scmp.eq.s32.totalorder %s17, 0
      %p189 = por %p187, %p188
      %p190 = scmp.ne.s32.totalorder %s182, %s184
      %p191 = scmp.eq.s32.totalorder %s22, 1
      %p192 = por %p190, %p191
      %p193 = scmp.ne.s32.totalorder %s184, %s185
      %p194 = scmp.eq.s32.totalorder %s22, 0
      %p195 = por %p193, %p194
      %p196 = scmp.ne.s32.totalorder %s184, %s185
      %p197 = scmp.eq.s32.totalorder %s23, 1
      %p198 = por %p196, %p197
      %p200 = scmp.ne.s32.totalorder %s185, %s199
      %p201 = scmp.eq.s32.totalorder %s23, 0
      %p202 = por %p200, %p201
      %s203 = ssub.s32 %s17, %s24
      %p204 = scmp.eq.s32.totalorder %s203, 0
      %s206 = sadd.s32 %s205, 1
      %s207 = scalar_select %p204, %s205, %s206
      %p210 = pneg %p204
      %p211 = scmp.eq.s32.totalorder %s17, 1
      %p212 = por %p210, %p211
      %p213 = scmp.ne.s32.totalorder %s205, %s208
      %p214 = scmp.eq.s32.totalorder %s17, 0
      %p215 = por %p213, %p214
      %p216 = scmp.ne.s32.totalorder %s205, %s208
      %p217 = scmp.eq.s32.totalorder %s22, 1
      %p218 = por %p216, %p217
      %p219 = scmp.ne.s32.totalorder %s208, %s209
      %p220 = scmp.eq.s32.totalorder %s22, 0
      %p221 = por %p219, %p220
      %p222 = scmp.ne.s32.totalorder %s208, %s209
      %p223 = scmp.eq.s32.totalorder %s23, 1
      %p224 = por %p222, %p223
      %p226 = scmp.ne.s32.totalorder %s209, %s225
      %p227 = scmp.eq.s32.totalorder %s23, 0
      %p228 = por %p226, %p227
      %p229 = scmp.le.s32.totalorder 1, %s17
      %p230 = scmp.lt.s32.totalorder %s17, 3
      %p231 = pnand %p229, %p230
      %p232 = pneg %p231
      // Predicated region
      $region9: #{tpu_custom_call.1} parent=5 // pred_check
        _
      $region10: #{tpu_custom_call.1} parent=5 // pred_check_branch
        %234 = sbr.rel (%p231) target = $region12
      $region11: #{tpu_custom_call.1} parent=5 // pred_region
        %s235 = ssub.s32 %s17, 1
        // Predicated region
        $region13: #{tpu_custom_call.1} parent=11 // pred_check
          %p236 = pneg %p90
        $region14: #{tpu_custom_call.1} parent=11 // pred_check_branch
          %238 = sbr.rel (%p236) target = $region16
        $region15: #{tpu_custom_call.1} parent=11 // pred_region
          _
        $region16: #{tpu_custom_call.1} parent=11 // pred_fallthru
          _
        // Predicated region
        $region17: #{tpu_custom_call.1} parent=11 // pred_check
          %p239 = pneg %p111
        $region18: #{tpu_custom_call.1} parent=11 // pred_check_branch
          %241 = sbr.rel (%p239) target = $region20
        $region19: #{tpu_custom_call.1} parent=11 // pred_region
          _
        $region20: #{tpu_custom_call.1} parent=11 // pred_fallthru
          _
        // Predicated region
        $region21: #{tpu_custom_call.1} parent=11 // pred_check
          %p242 = pneg %p132
        $region22: #{tpu_custom_call.1} parent=11 // pred_check_branch
          %244 = sbr.rel (%p242) target = $region24
        $region23: #{tpu_custom_call.1} parent=11 // pred_region
          _
        $region24: #{tpu_custom_call.1} parent=11 // pred_fallthru
          _
        // Predicated region
        $region25: #{tpu_custom_call.1} parent=11 // pred_check
          %p245 = pneg %p153
        $region26: #{tpu_custom_call.1} parent=11 // pred_check_branch
          %247 = sbr.rel (%p245) target = $region28
        $region27: #{tpu_custom_call.1} parent=11 // pred_region
          _
        $region28: #{tpu_custom_call.1} parent=11 // pred_fallthru
          _
        // Predicated region
        $region29: #{tpu_custom_call.1} parent=11 // pred_check
          %p248 = pneg %p174
        $region30: #{tpu_custom_call.1} parent=11 // pred_check_branch
          %250 = sbr.rel (%p248) target = $region32
        $region31: #{tpu_custom_call.1} parent=11 // pred_region
          _
        $region32: #{tpu_custom_call.1} parent=11 // pred_fallthru
          _
        // Predicated region
        $region33: #{tpu_custom_call.1} parent=11 // pred_check
          %p251 = pneg %p195
        $region34: #{tpu_custom_call.1} parent=11 // pred_check_branch
          %253 = sbr.rel (%p251) target = $region36
        $region35: #{tpu_custom_call.1} parent=11 // pred_region
          _
        $region36: #{tpu_custom_call.1} parent=11 // pred_fallthru
          _
      $region12: #{tpu_custom_call.1} parent=5 // pred_fallthru
        _
      %p254 = scmp.lt.s32.totalorder %s17, 2
      // Predicated region
      $region37: #{tpu_custom_call.1} parent=5 // pred_check
        %p255 = pneg %p254
      $region38: #{tpu_custom_call.1} parent=5 // pred_check_branch
        %257 = sbr.rel (%p255) target = $region40
      $region39: #{tpu_custom_call.1} parent=5 // pred_region
        // Predicated region
        $region41: #{tpu_custom_call.1} parent=39 // pred_check
          %p258 = pneg %p37
        $region42: #{tpu_custom_call.1} parent=39 // pred_check_branch
          %260 = sbr.rel (%p258) target = $region44
        $region43: #{tpu_custom_call.1} parent=39 // pred_region
          #allocation5 [shape = 'u32[6]{0}', space=smem, size = 0x18, scoped, tag = 'DMA stride descriptor']
          %s261 = sand.u32 %s27, 1
          %s262 = scalar_lea.sflag [#allocation3], %s261
          %s263 = sand.u32 %s27, 1
          %s264 = smul.addr %s263, 384
          %s265 = scalar_lea.vmem [#allocation2], %s264
          %s266 = smul.u32 16, %s17
          %s268 = ssub.s32 6144, 6144
          %269 = vsyncadd %s262, %s268
          %s270 = smul.addr %s266, 64
          %s271 = scalar_lea.hbm %s0, %s270
          %s273 = sshll.u32 1, 14
          %s274 = sxor.u32 4294967295, %s273
          %s276 = sld [smem:[#allocation0]]
          %s277 = sadd.s32 2, %s276
          %s279 = sshll.u32 7, 26
          %s280 = sxor.u32 4294967295, %s279
          %s281 = sand.u32 0, %s280
          %s282 = sshll.u32 %s277, 26
          %s283 = sor.u32 %s281, %s282
          %s284 = sshll.u32 %s265, 4
          %s285 = int_to_ptr.vmem [resolvable:$true] %s284
          %291 = sst [smem:[#allocation5]] 2048
          %s292 = scalar_lea.smem [#allocation5], 1
          %293 = sst [smem:[%s292]] 1024
          %s294 = scalar_lea.smem [#allocation5], 2
          %295 = sst [smem:[%s294]] 16
          %s296 = scalar_lea.smem [#allocation5], 3
          %297 = sst [smem:[%s296]] 64
          %s298 = scalar_lea.smem [#allocation5], 4
          %299 = sst [smem:[%s298]] 64
          %s300 = scalar_lea.smem [#allocation5], 5
          %301 = sst [smem:[%s300]] 4
          %303 = dma.general %s271, 6144, %s285, %s262, [#allocation4], [#allocation5], %s283, 0
        $region44: #{tpu_custom_call.1} parent=39 // pred_fallthru
          _
        // Predicated region
        $region45: #{tpu_custom_call.1} parent=39 // pred_check
          %p304 = pneg %p63
        $region46: #{tpu_custom_call.1} parent=39 // pred_check_branch
          %306 = sbr.rel (%p304) target = $region48
        $region47: #{tpu_custom_call.1} parent=39 // pred_region
          %s307 = smul.u32 16, %s17
          %p308 = scmp.lt.s32.totalorder %s307, 31
          %s309 = scalar_select %p308, %s307, 31
          %s310 = smul.addr %s309, 8
          %s311 = scalar_lea.vmem %s1, %s310
          %s312 = smul.u32 16, %s17
        $region48: #{tpu_custom_call.1} parent=39 // pred_fallthru
          _
      $region40: #{tpu_custom_call.1} parent=5 // pred_fallthru
        _
      %p313 = scmp.le.s32.totalorder 1, %s17
      %p314 = scmp.lt.s32.totalorder %s17, 3
      %p315 = pnand %p313, %p314
      %p316 = pneg %p315
      // Predicated region
      $region49: #{tpu_custom_call.1} parent=5 // pred_check
        _
      $region50: #{tpu_custom_call.1} parent=5 // pred_check_branch
        %318 = sbr.rel (%p315) target = $region52
      $region51: #{tpu_custom_call.1} parent=5 // pred_region
        %s319 = ssub.s32 %s17, 1
        %s320 = sand.u32 %s30, 1
        %s321 = scalar_lea.sflag [#allocation3], %s320
        %s322 = sand.u32 %s30, 1
        %s323 = smul.addr %s322, 384
        %s324 = scalar_lea.vmem [#allocation2], %s323
        // Predicated region
        $region53: #{tpu_custom_call.1} parent=51 // pred_check
          %p325 = pneg %p43
        $region54: #{tpu_custom_call.1} parent=51 // pred_check_branch
          %327 = sbr.rel (%p325) target = $region56
        $region55: #{tpu_custom_call.1} parent=51 // pred_region
          %328 = dma.done %s321, 6144
        $region56: #{tpu_custom_call.1} parent=51 // pred_fallthru
          _
        %s329 = sand.u32 %s30, 1
        %s330 = scalar_lea.sflag [#allocation3], %s329
        %s331 = sand.u32 %s30, 1
        %s332 = smul.addr %s331, 384
        %s333 = scalar_lea.vmem [#allocation2], %s332
        %p334 = pneg %p43
        %p335 = pneg %p40
        %s336 = smul.u32 16, %s22
        %p337 = scmp.lt.s32.totalorder %s336, 31
        %s338 = scalar_select %p337, %s336, 31
        %s339 = smul.addr %s338, 8
        %s340 = scalar_lea.vmem %s1, %s339
        %p341 = pneg %p69
        %p342 = pneg %p66
        %p343 = pneg %p90
        %p344 = pneg %p87
        %p345 = pneg %p111
        %p346 = pneg %p108
        %p347 = pneg %p132
        %p348 = pneg %p129
        %p349 = pneg %p153
        %p350 = pneg %p150
        %p351 = pneg %p174
        %p352 = pneg %p171
        %p353 = pneg %p195
        %p354 = pneg %p192
        %p355 = pneg %p221
        %p356 = pneg %p218
        %s357 = smul.u32 16, %s22
        %p358 = scmp.lt.s32.totalorder %s357, 31
        %s359 = scalar_select %p358, %s357, 31
        %s360 = smul.addr %s359, 8
        %s361 = scalar_lea.vmem %s8, %s360
        %s362 = smul.u32 16, %s22
        %s363 = smul.u32 16, %s22
        %p364 = scmp.lt.s32.totalorder %s363, 31
        %s365 = scalar_select %p364, %s363, 31
        %s366 = smul.addr %s365, 8
        %s367 = scalar_lea.vmem %s1, %s366
        %s368 = smul.u32 16, %s22
        %s369 = smul.u32 16, %s22
        %p370 = scmp.lt.s32.totalorder %s369, 31
        %s371 = scalar_select %p370, %s369, 31
        %s372 = smul.addr %s371, 8
        %s373 = scalar_lea.vmem %s8, %s372
        %s374 = smul.u32 16, %s22
        %v376 = vld [vmem:[%s324] sm:$0xf]
        %v377 = vld [vmem:[%s324 + $0x4] sm:$0xf]
        %v378 = vld [vmem:[%s324 + $0x8] sm:$0xf]
        %v379 = vld [vmem:[%s324 + $0xc] sm:$0xf]
        %v380 = vld [vmem:[%s324 + $0x10] sm:$0xf]
        %v381 = vld [vmem:[%s324 + $0x14] sm:$0xf]
        %v382 = vld [vmem:[%s324 + $0x18] sm:$0xf]
        %v383 = vld [vmem:[%s324 + $0x1c] sm:$0xf]
        %v384 = vld [vmem:[%s324 + $0x20] sm:$0xf]
        %v385 = vld [vmem:[%s324 + $0x24] sm:$0xf]
        %v386 = vld [vmem:[%s324 + $0x28] sm:$0xf]
        %v387 = vld [vmem:[%s324 + $0x2c] sm:$0xf]
        %v388 = vld [vmem:[%s324 + $0x30] sm:$0xf]
        %v389 = vld [vmem:[%s324 + $0x34] sm:$0xf]
        %v390 = vld [vmem:[%s324 + $0x38] sm:$0xf]
        %v391 = vld [vmem:[%s324 + $0x3c] sm:$0xf]
        %v392 = vunpack.c.l.bf16 %v376
        %v393 = vunpack.c.l.bf16 %v377
        %v394 = vunpack.c.l.bf16 %v378
        %v395 = vunpack.c.l.bf16 %v379
        %v396 = vunpack.c.l.bf16 %v380
        %v397 = vunpack.c.l.bf16 %v381
        %v398 = vunpack.c.l.bf16 %v382
        %v399 = vunpack.c.l.bf16 %v383
        %v400 = vunpack.c.l.bf16 %v384
        %v401 = vunpack.c.l.bf16 %v385
        %v402 = vunpack.c.l.bf16 %v386
        %v403 = vunpack.c.l.bf16 %v387
        %v404 = vunpack.c.l.bf16 %v388
        %v405 = vunpack.c.l.bf16 %v389
        %v406 = vunpack.c.l.bf16 %v390
        %v407 = vunpack.c.l.bf16 %v391
        %s408 = scalar_lea.vmem %s324, 64 [#allocation2]
        %v409 = vld [vmem:[%s408] sm:$0xf]
        %v410 = vld [vmem:[%s408 + $0x4] sm:$0xf]
        %v411 = vld [vmem:[%s408 + $0x8] sm:$0xf]
        %v412 = vld [vmem:[%s408 + $0xc] sm:$0xf]
        %v413 = vld [vmem:[%s408 + $0x10] sm:$0xf]
        %v414 = vld [vmem:[%s408 + $0x14] sm:$0xf]
        %v415 = vld [vmem:[%s408 + $0x18] sm:$0xf]
        %v416 = vld [vmem:[%s408 + $0x1c] sm:$0xf]
        %v417 = vld [vmem:[%s408 + $0x20] sm:$0xf]
        %v418 = vld [vmem:[%s408 + $0x24] sm:$0xf]
        %v419 = vld [vmem:[%s408 + $0x28] sm:$0xf]
        %v420 = vld [vmem:[%s408 + $0x2c] sm:$0xf]
        %v421 = vld [vmem:[%s408 + $0x30] sm:$0xf]
        %v422 = vld [vmem:[%s408 + $0x34] sm:$0xf]
        %v423 = vld [vmem:[%s408 + $0x38] sm:$0xf]
        %v424 = vld [vmem:[%s408 + $0x3c] sm:$0xf]
        %v425 = vunpack.c.l.bf16 %v409
        %v426 = vunpack.c.l.bf16 %v410
        %v427 = vunpack.c.l.bf16 %v411
        %v428 = vunpack.c.l.bf16 %v412
        %v429 = vunpack.c.l.bf16 %v413
        %v430 = vunpack.c.l.bf16 %v414
        %v431 = vunpack.c.l.bf16 %v415
        %v432 = vunpack.c.l.bf16 %v416
        %v433 = vunpack.c.l.bf16 %v417
        %v434 = vunpack.c.l.bf16 %v418
        %v435 = vunpack.c.l.bf16 %v419
        %v436 = vunpack.c.l.bf16 %v420
        %v437 = vunpack.c.l.bf16 %v421
        %v438 = vunpack.c.l.bf16 %v422
        %v439 = vunpack.c.l.bf16 %v423
        %v440 = vunpack.c.l.bf16 %v424
        %v441 = vmul.f32 %v392, %v425
        %v442 = vmul.f32 %v393, %v426
        %v443 = vmul.f32 %v394, %v427
        %v444 = vmul.f32 %v395, %v428
        %v445 = vmul.f32 %v396, %v429
        %v446 = vmul.f32 %v397, %v430
        %v447 = vmul.f32 %v398, %v431
        %v448 = vmul.f32 %v399, %v432
        %v449 = vmul.f32 %v400, %v433
        %v450 = vmul.f32 %v401, %v434
        %v451 = vmul.f32 %v402, %v435
        %v452 = vmul.f32 %v403, %v436
        %v453 = vmul.f32 %v404, %v437
        %v454 = vmul.f32 %v405, %v438
        %v455 = vmul.f32 %v406, %v439
        %v456 = vmul.f32 %v407, %v440
        %s457 = scalar_lea.vmem %s324, 128 [#allocation2]
        %v458 = vld [vmem:[%s457] sm:$0xf]
        %v459 = vld [vmem:[%s457 + $0x4] sm:$0xf]
        %v460 = vld [vmem:[%s457 + $0x8] sm:$0xf]
        %v461 = vld [vmem:[%s457 + $0xc] sm:$0xf]
        %v462 = vld [vmem:[%s457 + $0x10] sm:$0xf]
        %v463 = vld [vmem:[%s457 + $0x14] sm:$0xf]
        %v464 = vld [vmem:[%s457 + $0x18] sm:$0xf]
        %v465 = vld [vmem:[%s457 + $0x1c] sm:$0xf]
        %v466 = vld [vmem:[%s457 + $0x20] sm:$0xf]
        %v467 = vld [vmem:[%s457 + $0x24] sm:$0xf]
        %v468 = vld [vmem:[%s457 + $0x28] sm:$0xf]
        %v469 = vld [vmem:[%s457 + $0x2c] sm:$0xf]
        %v470 = vld [vmem:[%s457 + $0x30] sm:$0xf]
        %v471 = vld [vmem:[%s457 + $0x34] sm:$0xf]
        %v472 = vld [vmem:[%s457 + $0x38] sm:$0xf]
        %v473 = vld [vmem:[%s457 + $0x3c] sm:$0xf]
        %v474 = vunpack.c.l.bf16 %v458
        %v475 = vunpack.c.l.bf16 %v459
        %v476 = vunpack.c.l.bf16 %v460
        %v477 = vunpack.c.l.bf16 %v461
        %v478 = vunpack.c.l.bf16 %v462
        %v479 = vunpack.c.l.bf16 %v463
        %v480 = vunpack.c.l.bf16 %v464
        %v481 = vunpack.c.l.bf16 %v465
        %v482 = vunpack.c.l.bf16 %v466
        %v483 = vunpack.c.l.bf16 %v467
        %v484 = vunpack.c.l.bf16 %v468
        %v485 = vunpack.c.l.bf16 %v469
        %v486 = vunpack.c.l.bf16 %v470
        %v487 = vunpack.c.l.bf16 %v471
        %v488 = vunpack.c.l.bf16 %v472
        %v489 = vunpack.c.l.bf16 %v473
        %v490 = vmul.f32 %v441, %v474
        %v491 = vmul.f32 %v442, %v475
        %v492 = vmul.f32 %v443, %v476
        %v493 = vmul.f32 %v444, %v477
        %v494 = vmul.f32 %v445, %v478
        %v495 = vmul.f32 %v446, %v479
        %v496 = vmul.f32 %v447, %v480
        %v497 = vmul.f32 %v448, %v481
        %v498 = vmul.f32 %v449, %v482
        %v499 = vmul.f32 %v450, %v483
        %v500 = vmul.f32 %v451, %v484
        %v501 = vmul.f32 %v452, %v485
        %v502 = vmul.f32 %v453, %v486
        %v503 = vmul.f32 %v454, %v487
        %v504 = vmul.f32 %v455, %v488
        %v505 = vmul.f32 %v456, %v489
        %s506 = scalar_lea.vmem %s324, 192 [#allocation2]
        %v507 = vld [vmem:[%s506] sm:$0xf]
        %v508 = vld [vmem:[%s506 + $0x4] sm:$0xf]
        %v509 = vld [vmem:[%s506 + $0x8] sm:$0xf]
        %v510 = vld [vmem:[%s506 + $0xc] sm:$0xf]
        %v511 = vld [vmem:[%s506 + $0x10] sm:$0xf]
        %v512 = vld [vmem:[%s506 + $0x14] sm:$0xf]
        %v513 = vld [vmem:[%s506 + $0x18] sm:$0xf]
        %v514 = vld [vmem:[%s506 + $0x1c] sm:$0xf]
        %v515 = vld [vmem:[%s506 + $0x20] sm:$0xf]
        %v516 = vld [vmem:[%s506 + $0x24] sm:$0xf]
        %v517 = vld [vmem:[%s506 + $0x28] sm:$0xf]
        %v518 = vld [vmem:[%s506 + $0x2c] sm:$0xf]
        %v519 = vld [vmem:[%s506 + $0x30] sm:$0xf]
        %v520 = vld [vmem:[%s506 + $0x34] sm:$0xf]
        %v521 = vld [vmem:[%s506 + $0x38] sm:$0xf]
        %v522 = vld [vmem:[%s506 + $0x3c] sm:$0xf]
        %v523 = vunpack.c.l.bf16 %v507
        %v524 = vunpack.c.l.bf16 %v508
        %v525 = vunpack.c.l.bf16 %v509
        %v526 = vunpack.c.l.bf16 %v510
        %v527 = vunpack.c.l.bf16 %v511
        %v528 = vunpack.c.l.bf16 %v512
        %v529 = vunpack.c.l.bf16 %v513
        %v530 = vunpack.c.l.bf16 %v514
        %v531 = vunpack.c.l.bf16 %v515
        %v532 = vunpack.c.l.bf16 %v516
        %v533 = vunpack.c.l.bf16 %v517
        %v534 = vunpack.c.l.bf16 %v518
        %v535 = vunpack.c.l.bf16 %v519
        %v536 = vunpack.c.l.bf16 %v520
        %v537 = vunpack.c.l.bf16 %v521
        %v538 = vunpack.c.l.bf16 %v522
        %v539 = vmul.f32 %v490, %v523
        %v540 = vmul.f32 %v491, %v524
        %v541 = vmul.f32 %v492, %v525
        %v542 = vmul.f32 %v493, %v526
        %v543 = vmul.f32 %v494, %v527
        %v544 = vmul.f32 %v495, %v528
        %v545 = vmul.f32 %v496, %v529
        %v546 = vmul.f32 %v497, %v530
        %v547 = vmul.f32 %v498, %v531
        %v548 = vmul.f32 %v499, %v532
        %v549 = vmul.f32 %v500, %v533
        %v550 = vmul.f32 %v501, %v534
        %v551 = vmul.f32 %v502, %v535
        %v552 = vmul.f32 %v503, %v536
        %v553 = vmul.f32 %v504, %v537
        %v554 = vmul.f32 %v505, %v538
        %s555 = scalar_lea.vmem %s324, 256 [#allocation2]
        %v556 = vld [vmem:[%s555] sm:$0xf]
        %v557 = vld [vmem:[%s555 + $0x4] sm:$0xf]
        %v558 = vld [vmem:[%s555 + $0x8] sm:$0xf]
        %v559 = vld [vmem:[%s555 + $0xc] sm:$0xf]
        %v560 = vld [vmem:[%s555 + $0x10] sm:$0xf]
        %v561 = vld [vmem:[%s555 + $0x14] sm:$0xf]
        %v562 = vld [vmem:[%s555 + $0x18] sm:$0xf]
        %v563 = vld [vmem:[%s555 + $0x1c] sm:$0xf]
        %v564 = vld [vmem:[%s555 + $0x20] sm:$0xf]
        %v565 = vld [vmem:[%s555 + $0x24] sm:$0xf]
        %v566 = vld [vmem:[%s555 + $0x28] sm:$0xf]
        %v567 = vld [vmem:[%s555 + $0x2c] sm:$0xf]
        %v568 = vld [vmem:[%s555 + $0x30] sm:$0xf]
        %v569 = vld [vmem:[%s555 + $0x34] sm:$0xf]
        %v570 = vld [vmem:[%s555 + $0x38] sm:$0xf]
        %v571 = vld [vmem:[%s555 + $0x3c] sm:$0xf]
        %v572 = vunpack.c.l.bf16 %v556
        %v573 = vunpack.c.l.bf16 %v557
        %v574 = vunpack.c.l.bf16 %v558
        %v575 = vunpack.c.l.bf16 %v559
        %v576 = vunpack.c.l.bf16 %v560
        %v577 = vunpack.c.l.bf16 %v561
        %v578 = vunpack.c.l.bf16 %v562
        %v579 = vunpack.c.l.bf16 %v563
        %v580 = vunpack.c.l.bf16 %v564
        %v581 = vunpack.c.l.bf16 %v565
        %v582 = vunpack.c.l.bf16 %v566
        %v583 = vunpack.c.l.bf16 %v567
        %v584 = vunpack.c.l.bf16 %v568
        %v585 = vunpack.c.l.bf16 %v569
        %v586 = vunpack.c.l.bf16 %v570
        %v587 = vunpack.c.l.bf16 %v571
        %v588 = vmul.f32 %v539, %v572
        %v589 = vmul.f32 %v540, %v573
        %v590 = vmul.f32 %v541, %v574
        %v591 = vmul.f32 %v542, %v575
        %v592 = vmul.f32 %v543, %v576
        %v593 = vmul.f32 %v544, %v577
        %v594 = vmul.f32 %v545, %v578
        %v595 = vmul.f32 %v546, %v579
        %v596 = vmul.f32 %v547, %v580
        %v597 = vmul.f32 %v548, %v581
        %v598 = vmul.f32 %v549, %v582
        %v599 = vmul.f32 %v550, %v583
        %v600 = vmul.f32 %v551, %v584
        %v601 = vmul.f32 %v552, %v585
        %v602 = vmul.f32 %v553, %v586
        %v603 = vmul.f32 %v554, %v587
        %s604 = scalar_lea.vmem %s324, 320 [#allocation2]
        %v605 = vld [vmem:[%s604] sm:$0xf]
        %v606 = vld [vmem:[%s604 + $0x4] sm:$0xf]
        %v607 = vld [vmem:[%s604 + $0x8] sm:$0xf]
        %v608 = vld [vmem:[%s604 + $0xc] sm:$0xf]
        %v609 = vld [vmem:[%s604 + $0x10] sm:$0xf]
        %v610 = vld [vmem:[%s604 + $0x14] sm:$0xf]
        %v611 = vld [vmem:[%s604 + $0x18] sm:$0xf]
        %v612 = vld [vmem:[%s604 + $0x1c] sm:$0xf]
        %v613 = vld [vmem:[%s604 + $0x20] sm:$0xf]
        %v614 = vld [vmem:[%s604 + $0x24] sm:$0xf]
        %v615 = vld [vmem:[%s604 + $0x28] sm:$0xf]
        %v616 = vld [vmem:[%s604 + $0x2c] sm:$0xf]
        %v617 = vld [vmem:[%s604 + $0x30] sm:$0xf]
        %v618 = vld [vmem:[%s604 + $0x34] sm:$0xf]
        %v619 = vld [vmem:[%s604 + $0x38] sm:$0xf]
        %v620 = vld [vmem:[%s604 + $0x3c] sm:$0xf]
        %v621 = vunpack.c.l.bf16 %v605
        %v622 = vunpack.c.l.bf16 %v606
        %v623 = vunpack.c.l.bf16 %v607
        %v624 = vunpack.c.l.bf16 %v608
        %v625 = vunpack.c.l.bf16 %v609
        %v626 = vunpack.c.l.bf16 %v610
        %v627 = vunpack.c.l.bf16 %v611
        %v628 = vunpack.c.l.bf16 %v612
        %v629 = vunpack.c.l.bf16 %v613
        %v630 = vunpack.c.l.bf16 %v614
        %v631 = vunpack.c.l.bf16 %v615
        %v632 = vunpack.c.l.bf16 %v616
        %v633 = vunpack.c.l.bf16 %v617
        %v634 = vunpack.c.l.bf16 %v618
        %v635 = vunpack.c.l.bf16 %v619
        %v636 = vunpack.c.l.bf16 %v620
        %v637 = vmul.f32 %v588, %v621
        %v638 = vmul.f32 %v589, %v622
        %v639 = vmul.f32 %v590, %v623
        %v640 = vmul.f32 %v591, %v624
        %v641 = vmul.f32 %v592, %v625
        %v642 = vmul.f32 %v593, %v626
        %v643 = vmul.f32 %v594, %v627
        %v644 = vmul.f32 %v595, %v628
        %v645 = vmul.f32 %v596, %v629
        %v646 = vmul.f32 %v597, %v630
        %v647 = vmul.f32 %v598, %v631
        %v648 = vmul.f32 %v599, %v632
        %v649 = vmul.f32 %v600, %v633
        %v650 = vmul.f32 %v601, %v634
        %v651 = vmul.f32 %v602, %v635
        %v652 = vmul.f32 %v603, %v636
        %v653 = vpack.c.bf16 %v638, %v637
        %v654 = vpack.c.bf16 %v640, %v639
        %v655 = vpack.c.bf16 %v642, %v641
        %v656 = vpack.c.bf16 %v644, %v643
        %v657 = vpack.c.bf16 %v646, %v645
        %v658 = vpack.c.bf16 %v648, %v647
        %v659 = vpack.c.bf16 %v650, %v649
        %v660 = vpack.c.bf16 %v652, %v651
        %v661 = vld [vmem:[%s2] sm:$0xf]
        %v662 = vld [vmem:[%s2 + $0x4] sm:$0xf]
        %v663 = vld [vmem:[%s2 + $0x8] sm:$0xf]
        %v664 = vld [vmem:[%s2 + $0xc] sm:$0xf]
        %v665 = vld [vmem:[%s2 + $0x10] sm:$0xf]
        %v666 = vld [vmem:[%s2 + $0x14] sm:$0xf]
        %v667 = vld [vmem:[%s2 + $0x18] sm:$0xf]
        %v668 = vld [vmem:[%s2 + $0x1c] sm:$0xf]
        %v669 = vld [vmem:[%s2 + $0x20] sm:$0xf]
        %v670 = vld [vmem:[%s2 + $0x24] sm:$0xf]
        %v671 = vld [vmem:[%s2 + $0x28] sm:$0xf]
        %v672 = vld [vmem:[%s2 + $0x2c] sm:$0xf]
        %v673 = vld [vmem:[%s2 + $0x30] sm:$0xf]
        %v674 = vld [vmem:[%s2 + $0x34] sm:$0xf]
        %v675 = vld [vmem:[%s2 + $0x38] sm:$0xf]
        %v676 = vld [vmem:[%s2 + $0x3c] sm:$0xf]
        %v677 = vld [vmem:[%s3] sm:$0x1]
        %v679 = vlaneseq
        %v680 = vshrl.u32 %v679, 7
        %v681 = vsub.s32 0, %v680
        %v682 = vrot.slane %v677, %v681
        %v700 = vunpack.c.l.b16 %v661
        %v701 = vunpack.c.l.b16 %v662
        %v702 = vunpack.c.l.b16 %v663
        %v703 = vunpack.c.l.b16 %v664
        %v704 = vunpack.c.l.b16 %v665
        %v705 = vunpack.c.l.b16 %v666
        %v706 = vunpack.c.l.b16 %v667
        %v707 = vunpack.c.l.b16 %v668
        %v708 = vunpack.c.l.b16 %v669
        %v709 = vunpack.c.l.b16 %v670
        %v710 = vunpack.c.l.b16 %v671
        %v711 = vunpack.c.l.b16 %v672
        %v712 = vunpack.c.l.b16 %v673
        %v713 = vunpack.c.l.b16 %v674
        %v714 = vunpack.c.l.b16 %v675
        %v715 = vunpack.c.l.b16 %v676
        %v716 = vpack.c.b16 %v701, %v700
        %v717 = vpack.c.b16 %v703, %v702
        %v718 = vpack.c.b16 %v705, %v704
        %v719 = vpack.c.b16 %v707, %v706
        %v720 = vpack.c.b16 %v709, %v708
        %v721 = vpack.c.b16 %v711, %v710
        %v722 = vpack.c.b16 %v713, %v712
        %v723 = vpack.c.b16 %v715, %v714
        %732 = vmatprep.subr.bf16.mxu0 0
        %733 = vmatpush1.bf16.msra.mxu0 %v716
        %734 = vmatprep.subr.bf16.mxu0 0
        %735 = vmatpush1.bf16.msra.mxu0 %v717
        %736 = vmatprep.subr.bf16.mxu0 0
        %737 = vmatpush1.bf16.msra.mxu0 %v718
        %738 = vmatprep.subr.bf16.mxu0 0
        %739 = vmatpush1.bf16.msra.mxu0 %v719
        %740 = vmatprep.subr.bf16.mxu0 0
        %741 = vmatpush1.bf16.msra.mxu0 %v720
        %742 = vmatprep.subr.bf16.mxu0 0
        %743 = vmatpush1.bf16.msra.mxu0 %v721
        %744 = vmatprep.subr.bf16.mxu0 0
        %745 = vmatpush1.bf16.msra.mxu0 %v722
        %746 = vmatprep.subr.bf16.mxu0 0
        %747 = vmatpush1.bf16.msra.mxu0 %v723
        %748 = vmatprep.subr.bf16.mxu0 0
        %749 = vmatpush1.bf16.msra.mxu0 0
        %750 = vmatprep.subr.bf16.mxu0 0
        %751 = vmatpush1.bf16.msra.mxu0 0
        %752 = vmatprep.subr.bf16.mxu0 0
        %753 = vmatpush1.bf16.msra.mxu0 0
        %754 = vmatprep.subr.bf16.mxu0 0
        %755 = vmatpush1.bf16.msra.mxu0 0
        %756 = vmatprep.subr.bf16.mxu0 0
        %757 = vmatpush1.bf16.msra.mxu0 0
        %758 = vmatprep.subr.bf16.mxu0 0
        %759 = vmatpush1.bf16.msra.mxu0 0
        %760 = vmatprep.subr.bf16.mxu0 0
        %761 = vmatpush1.bf16.msra.mxu0 0
        %762 = vmatprep.subr.bf16.mxu0 0
        %763 = vmatpush1.bf16.msra.mxu0 0
        %764 = vmatprep.mubr.bf16.mxu0 0
        %765 = vmatmul.mubr.bf16.gmra.mrb[0].mxu0 %v653
        %v766 = vpop.f32.mrb[0].mxu0
        %v767 = vadd.f32 %v682, %v766
        %v768 = vpop.f32.mrb[0].mxu0
        %v769 = vpop.f32.mrb[0].mxu0
        %v770 = vadd.f32 %v682, %v769
        %v771 = vpop.f32.mrb[0].mxu0
        %772 = vmatprep.mubr.bf16.mxu0 0
        %773 = vmatmul.mubr.bf16.gmra.mrb[0].mxu0 %v654
        %v774 = vpop.f32.mrb[0].mxu0
        %v775 = vadd.f32 %v682, %v774
        %v776 = vpop.f32.mrb[0].mxu0
        %v777 = vpop.f32.mrb[0].mxu0
        %v778 = vadd.f32 %v682, %v777
        %v779 = vpop.f32.mrb[0].mxu0
        %780 = vmatprep.mubr.bf16.mxu0 0
        %781 = vmatmul.mubr.bf16.gmra.mrb[0].mxu0 %v655
        %v782 = vpop.f32.mrb[0].mxu0
        %v783 = vadd.f32 %v682, %v782
        %v784 = vpop.f32.mrb[0].mxu0
        %v785 = vpop.f32.mrb[0].mxu0
        %v786 = vadd.f32 %v682, %v785
        %v787 = vpop.f32.mrb[0].mxu0
        %788 = vmatprep.mubr.bf16.mxu0 0
        %789 = vmatmul.mubr.bf16.gmra.mrb[0].mxu0 %v656
        %v790 = vpop.f32.mrb[0].mxu0
        %v791 = vadd.f32 %v682, %v790
        %v792 = vpop.f32.mrb[0].mxu0
        %v793 = vpop.f32.mrb[0].mxu0
        %v794 = vadd.f32 %v682, %v793
        %v795 = vpop.f32.mrb[0].mxu0
        %796 = vmatprep.mubr.bf16.mxu0 0
        %797 = vmatmul.mubr.bf16.gmra.mrb[0].mxu0 %v657
        %v798 = vpop.f32.mrb[0].mxu0
        %v799 = vadd.f32 %v682, %v798
        %v800 = vpop.f32.mrb[0].mxu0
        %v801 = vpop.f32.mrb[0].mxu0
        %v802 = vadd.f32 %v682, %v801
        %v803 = vpop.f32.mrb[0].mxu0
        %804 = vmatprep.mubr.bf16.mxu0 0
        %805 = vmatmul.mubr.bf16.gmra.mrb[0].mxu0 %v658
        %v806 = vpop.f32.mrb[0].mxu0
        %v807 = vadd.f32 %v682, %v806
        %v808 = vpop.f32.mrb[0].mxu0
        %v809 = vpop.f32.mrb[0].mxu0
        %v810 = vadd.f32 %v682, %v809
        %v811 = vpop.f32.mrb[0].mxu0
        %812 = vmatprep.mubr.bf16.mxu0 0
        %813 = vmatmul.mubr.bf16.gmra.mrb[0].mxu0 %v659
        %v814 = vpop.f32.mrb[0].mxu0
        %v815 = vadd.f32 %v682, %v814
        %v816 = vpop.f32.mrb[0].mxu0
        %v817 = vpop.f32.mrb[0].mxu0
        %v818 = vadd.f32 %v682, %v817
        %v819 = vpop.f32.mrb[0].mxu0
        %820 = vmatprep.mubr.bf16.mxu0 0
        %821 = vmatmul.mubr.bf16.gmra.mrb[0].mxu0 %v660
        %v822 = vpop.f32.mrb[0].mxu0
        %v823 = vadd.f32 %v682, %v822
        %v824 = vpop.f32.mrb[0].mxu0
        %v825 = vpop.f32.mrb[0].mxu0
        %v826 = vadd.f32 %v682, %v825
        %v827 = vpop.f32.mrb[0].mxu0
        %828 = vdwg.mxu0
        %v829 = vmax.f32 %v767, 0.0
        %v830 = vmax.f32 %v770, 0.0
        %v831 = vmax.f32 %v775, 0.0
        %v832 = vmax.f32 %v778, 0.0
        %v833 = vmax.f32 %v783, 0.0
        %v834 = vmax.f32 %v786, 0.0
        %v835 = vmax.f32 %v791, 0.0
        %v836 = vmax.f32 %v794, 0.0
        %v837 = vmax.f32 %v799, 0.0
        %v838 = vmax.f32 %v802, 0.0
        %v839 = vmax.f32 %v807, 0.0
        %v840 = vmax.f32 %v810, 0.0
        %v841 = vmax.f32 %v815, 0.0
        %v842 = vmax.f32 %v818, 0.0
        %v843 = vmax.f32 %v823, 0.0
        %v844 = vmax.f32 %v826, 0.0
        %v845 = vpack.c.bf16 %v830, %v829
        %v846 = vpack.c.bf16 %v832, %v831
        %v847 = vpack.c.bf16 %v834, %v833
        %v848 = vpack.c.bf16 %v836, %v835
        %v849 = vpack.c.bf16 %v838, %v837
        %v850 = vpack.c.bf16 %v840, %v839
        %v851 = vpack.c.bf16 %v842, %v841
        %v852 = vpack.c.bf16 %v844, %v843
        %v853 = vld [vmem:[%s4] sm:$0xff]
        %v854 = vld [vmem:[%s4 + $0x8] sm:$0xff]
        %v855 = vld [vmem:[%s4 + $0x10] sm:$0xff]
        %v856 = vld [vmem:[%s4 + $0x18] sm:$0xff]
        %v857 = vld [vmem:[%s4 + $0x20] sm:$0xff]
        %v858 = vld [vmem:[%s4 + $0x28] sm:$0xff]
        %v859 = vld [vmem:[%s4 + $0x30] sm:$0xff]
        %v860 = vld [vmem:[%s4 + $0x38] sm:$0xff]
        %v861 = vld [vmem:[%s5] sm:$0x3]
        %v863 = vlaneseq
        %v864 = vshrl.u32 %v863, 7
        %v865 = vsub.s32 0, %v864
        %v866 = vrot.slane %v861, %v865
        %v867 = vlaneseq
        %v868 = vshrl.u32 %v867, 7
        %v869 = vsub.s32 1, %v868
        %v870 = vrot.slane %v861, %v869
        %v881 = vunpack.c.l.b16 %v853
        %v882 = vunpack.c.h.b16 %v853
        %v883 = vunpack.c.l.b16 %v854
        %v884 = vunpack.c.h.b16 %v854
        %v885 = vunpack.c.l.b16 %v855
        %v886 = vunpack.c.h.b16 %v855
        %v887 = vunpack.c.l.b16 %v856
        %v888 = vunpack.c.h.b16 %v856
        %v889 = vunpack.c.l.b16 %v857
        %v890 = vunpack.c.h.b16 %v857
        %v891 = vunpack.c.l.b16 %v858
        %v892 = vunpack.c.h.b16 %v858
        %v893 = vunpack.c.l.b16 %v859
        %v894 = vunpack.c.h.b16 %v859
        %v895 = vunpack.c.l.b16 %v860
        %v896 = vunpack.c.h.b16 %v860
        %v897 = vpack.c.b16 %v883, %v881
        %v898 = vpack.c.b16 %v884, %v882
        %v899 = vpack.c.b16 %v887, %v885
        %v900 = vpack.c.b16 %v888, %v886
        %v901 = vpack.c.b16 %v891, %v889
        %v902 = vpack.c.b16 %v892, %v890
        %v903 = vpack.c.b16 %v895, %v893
        %v904 = vpack.c.b16 %v896, %v894
        %vm913 = vcmask 523264
        %v915 = vsel %vm913, %v845, 0
        %v918 = vsel %vm913, %v846, 0
        %v921 = vsel %vm913, %v847, 0
        %v924 = vsel %vm913, %v848, 0
        %v927 = vsel %vm913, %v849, 0
        %v930 = vsel %vm913, %v850, 0
        %v933 = vsel %vm913, %v851, 0
        %v936 = vsel %vm913, %v852, 0
        %938 = vmatprep.subr.bf16.mxu0 %v898
        %939 = vmatpush1.bf16.msra.mxu0 %v897
        %940 = vmatprep.subr.bf16.mxu0 %v900
        %941 = vmatpush1.bf16.msra.mxu0 %v899
        %942 = vmatprep.subr.bf16.mxu0 %v902
        %943 = vmatpush1.bf16.msra.mxu0 %v901
        %944 = vmatprep.subr.bf16.mxu0 %v904
        %945 = vmatpush1.bf16.msra.mxu0 %v903
        %946 = vmatprep.subr.bf16.mxu0 0
        %947 = vmatpush1.bf16.msra.mxu0 0
        %948 = vmatprep.subr.bf16.mxu0 0
        %949 = vmatpush1.bf16.msra.mxu0 0
        %950 = vmatprep.subr.bf16.mxu0 0
        %951 = vmatpush1.bf16.msra.mxu0 0
        %952 = vmatprep.subr.bf16.mxu0 0
        %953 = vmatpush1.bf16.msra.mxu0 0
        %954 = vmatprep.subr.bf16.mxu0 0
        %955 = vmatpush1.bf16.msra.mxu0 0
        %956 = vmatprep.subr.bf16.mxu0 0
        %957 = vmatpush1.bf16.msra.mxu0 0
        %958 = vmatprep.subr.bf16.mxu0 0
        %959 = vmatpush1.bf16.msra.mxu0 0
        %960 = vmatprep.subr.bf16.mxu0 0
        %961 = vmatpush1.bf16.msra.mxu0 0
        %962 = vmatprep.subr.bf16.mxu0 0
        %963 = vmatpush1.bf16.msra.mxu0 0
        %964 = vmatprep.subr.bf16.mxu0 0
        %965 = vmatpush1.bf16.msra.mxu0 0
        %966 = vmatprep.subr.bf16.mxu0 0
        %967 = vmatpush1.bf16.msra.mxu0 0
        %968 = vmatprep.subr.bf16.mxu0 0
        %969 = vmatpush1.bf16.msra.mxu0 0
        %970 = vmatprep.mubr.bf16.mxu0 0
        %971 = vmatmul.mubr.bf16.gmra.mrb[0].mxu0 %v915
        %v972 = vpop.f32.mrb[0].mxu0
        %v973 = vadd.f32 %v866, %v972
        %v974 = vpop.f32.mrb[0].mxu0
        %v975 = vadd.f32 %v870, %v974
        %v976 = vpop.f32.mrb[0].mxu0
        %v977 = vadd.f32 %v866, %v976
        %v978 = vpop.f32.mrb[0].mxu0
        %v979 = vadd.f32 %v870, %v978
        %980 = vmatprep.mubr.bf16.mxu0 0
        %981 = vmatmul.mubr.bf16.gmra.mrb[0].mxu0 %v918
        %v982 = vpop.f32.mrb[0].mxu0
        %v983 = vadd.f32 %v866, %v982
        %v984 = vpop.f32.mrb[0].mxu0
        %v985 = vadd.f32 %v870, %v984
        %v986 = vpop.f32.mrb[0].mxu0
        %v987 = vadd.f32 %v866, %v986
        %v988 = vpop.f32.mrb[0].mxu0
        %v989 = vadd.f32 %v870, %v988
        %990 = vmatprep.mubr.bf16.mxu0 0
        %991 = vmatmul.mubr.bf16.gmra.mrb[0].mxu0 %v921
        %v992 = vpop.f32.mrb[0].mxu0
        %v993 = vadd.f32 %v866, %v992
        %v994 = vpop.f32.mrb[0].mxu0
        %v995 = vadd.f32 %v870, %v994
        %v996 = vpop.f32.mrb[0].mxu0
        %v997 = vadd.f32 %v866, %v996
        %v998 = vpop.f32.mrb[0].mxu0
        %v999 = vadd.f32 %v870, %v998
        %1000 = vmatprep.mubr.bf16.mxu0 0
        %1001 = vmatmul.mubr.bf16.gmra.mrb[0].mxu0 %v924
        %v1002 = vpop.f32.mrb[0].mxu0
        %v1003 = vadd.f32 %v866, %v1002
        %v1004 = vpop.f32.mrb[0].mxu0
        %v1005 = vadd.f32 %v870, %v1004
        %v1006 = vpop.f32.mrb[0].mxu0
        %v1007 = vadd.f32 %v866, %v1006
        %v1008 = vpop.f32.mrb[0].mxu0
        %v1009 = vadd.f32 %v870, %v1008
        %1010 = vmatprep.mubr.bf16.mxu0 0
        %1011 = vmatmul.mubr.bf16.gmra.mrb[0].mxu0 %v927
        %v1012 = vpop.f32.mrb[0].mxu0
        %v1013 = vadd.f32 %v866, %v1012
        %v1014 = vpop.f32.mrb[0].mxu0
        %v1015 = vadd.f32 %v870, %v1014
        %v1016 = vpop.f32.mrb[0].mxu0
        %v1017 = vadd.f32 %v866, %v1016
        %v1018 = vpop.f32.mrb[0].mxu0
        %v1019 = vadd.f32 %v870, %v1018
        %1020 = vmatprep.mubr.bf16.mxu0 0
        %1021 = vmatmul.mubr.bf16.gmra.mrb[0].mxu0 %v930
        %v1022 = vpop.f32.mrb[0].mxu0
        %v1023 = vadd.f32 %v866, %v1022
        %v1024 = vpop.f32.mrb[0].mxu0
        %v1025 = vadd.f32 %v870, %v1024
        %v1026 = vpop.f32.mrb[0].mxu0
        %v1027 = vadd.f32 %v866, %v1026
        %v1028 = vpop.f32.mrb[0].mxu0
        %v1029 = vadd.f32 %v870, %v1028
        %1030 = vmatprep.mubr.bf16.mxu0 0
        %1031 = vmatmul.mubr.bf16.gmra.mrb[0].mxu0 %v933
        %v1032 = vpop.f32.mrb[0].mxu0
        %v1033 = vadd.f32 %v866, %v1032
        %v1034 = vpop.f32.mrb[0].mxu0
        %v1035 = vadd.f32 %v870, %v1034
        %v1036 = vpop.f32.mrb[0].mxu0
        %v1037 = vadd.f32 %v866, %v1036
        %v1038 = vpop.f32.mrb[0].mxu0
        %v1039 = vadd.f32 %v870, %v1038
        %1040 = vmatprep.mubr.bf16.mxu0 0
        %1041 = vmatmul.mubr.bf16.gmra.mrb[0].mxu0 %v936
        %v1042 = vpop.f32.mrb[0].mxu0
        %v1043 = vadd.f32 %v866, %v1042
        %v1044 = vpop.f32.mrb[0].mxu0
        %v1045 = vadd.f32 %v870, %v1044
        %v1046 = vpop.f32.mrb[0].mxu0
        %v1047 = vadd.f32 %v866, %v1046
        %v1048 = vpop.f32.mrb[0].mxu0
        %v1049 = vadd.f32 %v870, %v1048
        %1050 = vdwg.mxu0
        %v1051 = vmax.f32 %v973, 0.0
        %v1052 = vmax.f32 %v975, 0.0
        %v1053 = vmax.f32 %v977, 0.0
        %v1054 = vmax.f32 %v979, 0.0
        %v1055 = vmax.f32 %v983, 0.0
        %v1056 = vmax.f32 %v985, 0.0
        %v1057 = vmax.f32 %v987, 0.0
        %v1058 = vmax.f32 %v989, 0.0
        %v1059 = vmax.f32 %v993, 0.0
        %v1060 = vmax.f32 %v995, 0.0
        %v1061 = vmax.f32 %v997, 0.0
        %v1062 = vmax.f32 %v999, 0.0
        %v1063 = vmax.f32 %v1003, 0.0
        %v1064 = vmax.f32 %v1005, 0.0
        %v1065 = vmax.f32 %v1007, 0.0
        %v1066 = vmax.f32 %v1009, 0.0
        %v1067 = vmax.f32 %v1013, 0.0
        %v1068 = vmax.f32 %v1015, 0.0
        %v1069 = vmax.f32 %v1017, 0.0
        %v1070 = vmax.f32 %v1019, 0.0
        %v1071 = vmax.f32 %v1023, 0.0
        %v1072 = vmax.f32 %v1025, 0.0
        %v1073 = vmax.f32 %v1027, 0.0
        %v1074 = vmax.f32 %v1029, 0.0
        %v1075 = vmax.f32 %v1033, 0.0
        %v1076 = vmax.f32 %v1035, 0.0
        %v1077 = vmax.f32 %v1037, 0.0
        %v1078 = vmax.f32 %v1039, 0.0
        %v1079 = vmax.f32 %v1043, 0.0
        %v1080 = vmax.f32 %v1045, 0.0
        %v1081 = vmax.f32 %v1047, 0.0
        %v1082 = vmax.f32 %v1049, 0.0
        %v1083 = vpack.c.bf16 %v1053, %v1051
        %v1084 = vpack.c.bf16 %v1054, %v1052
        %v1085 = vpack.c.bf16 %v1057, %v1055
        %v1086 = vpack.c.bf16 %v1058, %v1056
        %v1087 = vpack.c.bf16 %v1061, %v1059
        %v1088 = vpack.c.bf16 %v1062, %v1060
        %v1089 = vpack.c.bf16 %v1065, %v1063
        %v1090 = vpack.c.bf16 %v1066, %v1064
        %v1091 = vpack.c.bf16 %v1069, %v1067
        %v1092 = vpack.c.bf16 %v1070, %v1068
        %v1093 = vpack.c.bf16 %v1073, %v1071
        %v1094 = vpack.c.bf16 %v1074, %v1072
        %v1095 = vpack.c.bf16 %v1077, %v1075
        %v1096 = vpack.c.bf16 %v1078, %v1076
        %v1097 = vpack.c.bf16 %v1081, %v1079
        %v1098 = vpack.c.bf16 %v1082, %v1080
        %v1099 = vld [vmem:[%s6] sm:$0xf]
        %v1100 = vld [vmem:[%s6 + $0x4] sm:$0xf]
        %v1101 = vld [vmem:[%s6 + $0x8] sm:$0xf]
        %v1102 = vld [vmem:[%s6 + $0xc] sm:$0xf]
        %v1103 = vld [vmem:[%s6 + $0x10] sm:$0xf]
        %v1104 = vld [vmem:[%s6 + $0x14] sm:$0xf]
        %v1105 = vld [vmem:[%s6 + $0x18] sm:$0xf]
        %v1106 = vld [vmem:[%s6 + $0x1c] sm:$0xf]
        %v1107 = vld [vmem:[%s6 + $0x20] sm:$0xf]
        %v1108 = vld [vmem:[%s6 + $0x24] sm:$0xf]
        %v1109 = vld [vmem:[%s6 + $0x28] sm:$0xf]
        %v1110 = vld [vmem:[%s6 + $0x2c] sm:$0xf]
        %v1111 = vld [vmem:[%s6 + $0x30] sm:$0xf]
        %v1112 = vld [vmem:[%s6 + $0x34] sm:$0xf]
        %v1113 = vld [vmem:[%s6 + $0x38] sm:$0xf]
        %v1114 = vld [vmem:[%s6 + $0x3c] sm:$0xf]
        %v1115 = vld [vmem:[%s6 + $0x40] sm:$0xf]
        %v1116 = vld [vmem:[%s6 + $0x44] sm:$0xf]
        %v1117 = vld [vmem:[%s6 + $0x48] sm:$0xf]
        %v1118 = vld [vmem:[%s6 + $0x4c] sm:$0xf]
        %v1119 = vld [vmem:[%s6 + $0x50] sm:$0xf]
        %v1120 = vld [vmem:[%s6 + $0x54] sm:$0xf]
        %v1121 = vld [vmem:[%s6 + $0x58] sm:$0xf]
        %v1122 = vld [vmem:[%s6 + $0x5c] sm:$0xf]
        %v1123 = vld [vmem:[%s7] sm:$0x1]
        %v1125 = vlaneseq
        %v1126 = vshrl.u32 %v1125, 7
        %v1127 = vsub.s32 0, %v1126
        %v1128 = vrot.slane %v1123, %v1127
        %v1154 = vunpack.c.l.b16 %v1099
        %v1155 = vunpack.c.l.b16 %v1100
        %v1156 = vunpack.c.l.b16 %v1101
        %v1157 = vunpack.c.l.b16 %v1102
        %v1158 = vunpack.c.l.b16 %v1103
        %v1159 = vunpack.c.l.b16 %v1104
        %v1160 = vunpack.c.l.b16 %v1105
        %v1161 = vunpack.c.l.b16 %v1106
        %v1162 = vunpack.c.l.b16 %v1107
        %v1163 = vunpack.c.l.b16 %v1108
        %v1164 = vunpack.c.l.b16 %v1109
        %v1165 = vunpack.c.l.b16 %v1110
        %v1166 = vunpack.c.l.b16 %v1111
        %v1167 = vunpack.c.l.b16 %v1112
        %v1168 = vunpack.c.l.b16 %v1113
        %v1169 = vunpack.c.l.b16 %v1114
        %v1170 = vunpack.c.l.b16 %v1115
        %v1171 = vunpack.c.l.b16 %v1116
        %v1172 = vunpack.c.l.b16 %v1117
        %v1173 = vunpack.c.l.b16 %v1118
        %v1174 = vunpack.c.l.b16 %v1119
        %v1175 = vunpack.c.l.b16 %v1120
        %v1176 = vunpack.c.l.b16 %v1121
        %v1177 = vunpack.c.l.b16 %v1122
        %v1178 = vpack.c.b16 %v1155, %v1154
        %v1179 = vpack.c.b16 %v1157, %v1156
        %v1180 = vpack.c.b16 %v1159, %v1158
        %v1181 = vpack.c.b16 %v1161, %v1160
        %v1182 = vpack.c.b16 %v1163, %v1162
        %v1183 = vpack.c.b16 %v1165, %v1164
        %v1184 = vpack.c.b16 %v1167, %v1166
        %v1185 = vpack.c.b16 %v1169, %v1168
        %v1186 = vpack.c.b16 %v1171, %v1170
        %v1187 = vpack.c.b16 %v1173, %v1172
        %v1188 = vpack.c.b16 %v1175, %v1174
        %v1189 = vpack.c.b16 %v1177, %v1176
        %v1203 = vsel %vm913, %v1084, 0
        %v1206 = vsel %vm913, %v1086, 0
        %v1209 = vsel %vm913, %v1088, 0
        %v1212 = vsel %vm913, %v1090, 0
        %v1215 = vsel %vm913, %v1092, 0
        %v1218 = vsel %vm913, %v1094, 0
        %v1221 = vsel %vm913, %v1096, 0
        %v1224 = vsel %vm913, %v1098, 0
        %1226 = vmatprep.subr.bf16.mxu0 0
        %1227 = vmatpush1.bf16.msra.mxu0 %v1178
        %1228 = vmatprep.subr.bf16.mxu0 0
        %1229 = vmatpush1.bf16.msra.mxu0 %v1179
        %1230 = vmatprep.subr.bf16.mxu0 0
        %1231 = vmatpush1.bf16.msra.mxu0 %v1180
        %1232 = vmatprep.subr.bf16.mxu0 0
        %1233 = vmatpush1.bf16.msra.mxu0 %v1181
        %1234 = vmatprep.subr.bf16.mxu0 0
        %1235 = vmatpush1.bf16.msra.mxu0 %v1182
        %1236 = vmatprep.subr.bf16.mxu0 0
        %1237 = vmatpush1.bf16.msra.mxu0 %v1183
        %1238 = vmatprep.subr.bf16.mxu0 0
        %1239 = vmatpush1.bf16.msra.mxu0 %v1184
        %1240 = vmatprep.subr.bf16.mxu0 0
        %1241 = vmatpush1.bf16.msra.mxu0 %v1185
        %1242 = vmatprep.subr.bf16.mxu0 0
        %1243 = vmatpush1.bf16.msra.mxu0 %v1186
        %1244 = vmatprep.subr.bf16.mxu0 0
        %1245 = vmatpush1.bf16.msra.mxu0 %v1187
        %1246 = vmatprep.subr.bf16.mxu0 0
        %1247 = vmatpush1.bf16.msra.mxu0 %v1188
        %1248 = vmatprep.subr.bf16.mxu0 0
        %1249 = vmatpush1.bf16.msra.mxu0 %v1189
        %1250 = vmatprep.subr.bf16.mxu0 0
        %1251 = vmatpush1.bf16.msra.mxu0 0
        %1252 = vmatprep.subr.bf16.mxu0 0
        %1253 = vmatpush1.bf16.msra.mxu0 0
        %1254 = vmatprep.subr.bf16.mxu0 0
        %1255 = vmatpush1.bf16.msra.mxu0 0
        %1256 = vmatprep.subr.bf16.mxu0 0
        %1257 = vmatpush1.bf16.msra.mxu0 0
        %1258 = vmatprep.mubr.bf16.mxu0 %v1203
        %1259 = vmatmul.mubr.bf16.gmra.mrb[0].mxu0 %v1083
        %v1260 = vpop.f32.mrb[0].mxu0
        %v1261 = vadd.f32 %v1128, %v1260
        %v1262 = vpop.f32.mrb[0].mxu0
        %v1263 = vpop.f32.mrb[0].mxu0
        %v1264 = vadd.f32 %v1128, %v1263
        %v1265 = vpop.f32.mrb[0].mxu0
        %1266 = vmatprep.mubr.bf16.mxu0 %v1206
        %1267 = vmatmul.mubr.bf16.gmra.mrb[0].mxu0 %v1085
        %v1268 = vpop.f32.mrb[0].mxu0
        %v1269 = vadd.f32 %v1128, %v1268
        %v1270 = vpop.f32.mrb[0].mxu0
        %v1271 = vpop.f32.mrb[0].mxu0
        %v1272 = vadd.f32 %v1128, %v1271
        %v1273 = vpop.f32.mrb[0].mxu0
        %1274 = vmatprep.mubr.bf16.mxu0 %v1209
        %1275 = vmatmul.mubr.bf16.gmra.mrb[0].mxu0 %v1087
        %v1276 = vpop.f32.mrb[0].mxu0
        %v1277 = vadd.f32 %v1128, %v1276
        %v1278 = vpop.f32.mrb[0].mxu0
        %v1279 = vpop.f32.mrb[0].mxu0
        %v1280 = vadd.f32 %v1128, %v1279
        %v1281 = vpop.f32.mrb[0].mxu0
        %1282 = vmatprep.mubr.bf16.mxu0 %v1212
        %1283 = vmatmul.mubr.bf16.gmra.mrb[0].mxu0 %v1089
        %v1284 = vpop.f32.mrb[0].mxu0
        %v1285 = vadd.f32 %v1128, %v1284
        %v1286 = vpop.f32.mrb[0].mxu0
        %v1287 = vpop.f32.mrb[0].mxu0
        %v1288 = vadd.f32 %v1128, %v1287
        %v1289 = vpop.f32.mrb[0].mxu0
        %1290 = vmatprep.mubr.bf16.mxu0 %v1215
        %1291 = vmatmul.mubr.bf16.gmra.mrb[0].mxu0 %v1091
        %v1292 = vpop.f32.mrb[0].mxu0
        %v1293 = vadd.f32 %v1128, %v1292
        %v1294 = vpop.f32.mrb[0].mxu0
        %v1295 = vpop.f32.mrb[0].mxu0
        %v1296 = vadd.f32 %v1128, %v1295
        %v1297 = vpop.f32.mrb[0].mxu0
        %1298 = vmatprep.mubr.bf16.mxu0 %v1218
        %1299 = vmatmul.mubr.bf16.gmra.mrb[0].mxu0 %v1093
        %v1300 = vpop.f32.mrb[0].mxu0
        %v1301 = vadd.f32 %v1128, %v1300
        %v1302 = vpop.f32.mrb[0].mxu0
        %v1303 = vpop.f32.mrb[0].mxu0
        %v1304 = vadd.f32 %v1128, %v1303
        %v1305 = vpop.f32.mrb[0].mxu0
        %1306 = vmatprep.mubr.bf16.mxu0 %v1221
        %1307 = vmatmul.mubr.bf16.gmra.mrb[0].mxu0 %v1095
        %v1308 = vpop.f32.mrb[0].mxu0
        %v1309 = vadd.f32 %v1128, %v1308
        %v1310 = vpop.f32.mrb[0].mxu0
        %v1311 = vpop.f32.mrb[0].mxu0
        %v1312 = vadd.f32 %v1128, %v1311
        %v1313 = vpop.f32.mrb[0].mxu0
        %1314 = vmatprep.mubr.bf16.mxu0 %v1224
        %1315 = vmatmul.mubr.bf16.gmra.mrb[0].mxu0 %v1097
        %v1316 = vpop.f32.mrb[0].mxu0
        %v1317 = vadd.f32 %v1128, %v1316
        %v1318 = vpop.f32.mrb[0].mxu0
        %v1319 = vpop.f32.mrb[0].mxu0
        %v1320 = vadd.f32 %v1128, %v1319
        %v1321 = vpop.f32.mrb[0].mxu0
        %1322 = vdwg.mxu0
        %v1323 = vld [vmem:[%s367] sm:$0xff]
        %v1324 = vld [vmem:[%s367 + $0x8] sm:$0xff]
        %v1325 = vld [vmem:[%s367 + $0x10] sm:$0xff]
        %v1326 = vld [vmem:[%s367 + $0x18] sm:$0xff]
        %v1327 = vld [vmem:[%s367 + $0x20] sm:$0xff]
        %v1328 = vld [vmem:[%s367 + $0x28] sm:$0xff]
        %v1329 = vld [vmem:[%s367 + $0x30] sm:$0xff]
        %v1330 = vld [vmem:[%s367 + $0x38] sm:$0xff]
        %v1331 = vld [vmem:[%s367 + $0x40] sm:$0xff]
        %v1332 = vld [vmem:[%s367 + $0x48] sm:$0xff]
        %v1333 = vld [vmem:[%s367 + $0x50] sm:$0xff]
        %v1334 = vld [vmem:[%s367 + $0x58] sm:$0xff]
        %v1335 = vld [vmem:[%s367 + $0x60] sm:$0xff]
        %v1336 = vld [vmem:[%s367 + $0x68] sm:$0xff]
        %v1337 = vld [vmem:[%s367 + $0x70] sm:$0xff]
        %v1338 = vld [vmem:[%s367 + $0x78] sm:$0xff]
        %v1339 = vadd.f32 %v1323, %v1261
        %v1340 = vadd.f32 %v1324, %v1264
        %v1341 = vadd.f32 %v1325, %v1269
        %v1342 = vadd.f32 %v1326, %v1272
        %v1343 = vadd.f32 %v1327, %v1277
        %v1344 = vadd.f32 %v1328, %v1280
        %v1345 = vadd.f32 %v1329, %v1285
        %v1346 = vadd.f32 %v1330, %v1288
        %v1347 = vadd.f32 %v1331, %v1293
        %v1348 = vadd.f32 %v1332, %v1296
        %v1349 = vadd.f32 %v1333, %v1301
        %v1350 = vadd.f32 %v1334, %v1304
        %v1351 = vadd.f32 %v1335, %v1309
        %v1352 = vadd.f32 %v1336, %v1312
        %v1353 = vadd.f32 %v1337, %v1317
        %v1354 = vadd.f32 %v1338, %v1320
        %vm1355 = vcmask 130048
        %1356 = vst.msk [vmem:[%s373] sm:$0xff] %vm1355, %v1339
        %1357 = vst.msk [vmem:[%s373 + $0x8] sm:$0xff] %vm1355, %v1340
        %1358 = vst.msk [vmem:[%s373 + $0x10] sm:$0xff] %vm1355, %v1341
        %1359 = vst.msk [vmem:[%s373 + $0x18] sm:$0xff] %vm1355, %v1342
        %1360 = vst.msk [vmem:[%s373 + $0x20] sm:$0xff] %vm1355, %v1343
        %1361 = vst.msk [vmem:[%s373 + $0x28] sm:$0xff] %vm1355, %v1344
        %1362 = vst.msk [vmem:[%s373 + $0x30] sm:$0xff] %vm1355, %v1345
        %1363 = vst.msk [vmem:[%s373 + $0x38] sm:$0xff] %vm1355, %v1346
        %1364 = vst.msk [vmem:[%s373 + $0x40] sm:$0xff] %vm1355, %v1347
        %1365 = vst.msk [vmem:[%s373 + $0x48] sm:$0xff] %vm1355, %v1348
        %1366 = vst.msk [vmem:[%s373 + $0x50] sm:$0xff] %vm1355, %v1349
        %1367 = vst.msk [vmem:[%s373 + $0x58] sm:$0xff] %vm1355, %v1350
        %1368 = vst.msk [vmem:[%s373 + $0x60] sm:$0xff] %vm1355, %v1351
        %1369 = vst.msk [vmem:[%s373 + $0x68] sm:$0xff] %vm1355, %v1352
        %1370 = vst.msk [vmem:[%s373 + $0x70] sm:$0xff] %vm1355, %v1353
        %1371 = vst.msk [vmem:[%s373 + $0x78] sm:$0xff] %vm1355, %v1354
        %s1372 = smul.u32 16, %s22
        %p1373 = scmp.lt.s32.totalorder %s1372, 31
        %s1374 = scalar_select %p1373, %s1372, 31
        %s1375 = smul.addr %s1374, 8
        %s1376 = scalar_lea.vmem %s8, %s1375
        // Predicated region
        $region57: #{tpu_custom_call.1} parent=51 // pred_check
          %p1377 = pneg %p218
        $region58: #{tpu_custom_call.1} parent=51 // pred_check_branch
          %1379 = sbr.rel (%p1377) target = $region60
        $region59: #{tpu_custom_call.1} parent=51 // pred_region
          %s1380 = smul.u32 16, %s22
        $region60: #{tpu_custom_call.1} parent=51 // pred_fallthru
          _
      $region52: #{tpu_custom_call.1} parent=5 // pred_fallthru
        _
      %p1381 = scmp.le.s32.totalorder 2, %s17
      // Predicated region
      $region61: #{tpu_custom_call.1} parent=5 // pred_check
        %p1382 = pneg %p1381
      $region62: #{tpu_custom_call.1} parent=5 // pred_check_branch
        %1384 = sbr.rel (%p1382) target = $region64
      $region63: #{tpu_custom_call.1} parent=5 // pred_region
        %s1385 = ssub.s32 %s17, 2
        // Predicated region
        $region65: #{tpu_custom_call.1} parent=63 // pred_check
          %p1386 = pneg %p224
        $region66: #{tpu_custom_call.1} parent=63 // pred_check_branch
          %1388 = sbr.rel (%p1386) target = $region68
        $region67: #{tpu_custom_call.1} parent=63 // pred_region
          %s1389 = smul.u32 16, %s23
          %p1390 = scmp.lt.s32.totalorder %s1389, 31
          %s1391 = scalar_select %p1390, %s1389, 31
          %s1392 = smul.addr %s1391, 8
          %s1393 = scalar_lea.vmem %s8, %s1392
        $region68: #{tpu_custom_call.1} parent=63 // pred_fallthru
          _
      $region64: #{tpu_custom_call.1} parent=5 // pred_fallthru
        _
    $region6: #{tpu_custom_call.1} parent=1 // loop_footer
      %s21 = sadd.s32 1, %s17
    $region7: #{tpu_custom_call.1} parent=1 // loop_footer_branch
      %16 = sbr.rel target = $region3
    $region8: #{tpu_custom_call.1} parent=1 // loop_exit
      _
    %1394 = vsyncpa [#allocation3], 1
    %s1395 = scalar_lea.sflag [#allocation3], 1
    %1396 = vsyncpa %s1395, 1

</llo_original>
